<compile_context>
chip_gen: v6e
topology: v6e:2x2x1
jax: 0.10.0
libtpu: 0.0.40
codegen_flags: <defaults>
</compile_context>

<pallas_src>
import jax
import jax.numpy as jnp
from jax.experimental import pallas as pl
from jax.experimental.pallas import tpu as pltpu


_WEIGHT_NAMES = ("wq1_cf", "bq1_cf", "wq2_cf", "bq2_cf",
                 "wk1", "bk1", "wk2", "bk2",
                 "wv_cf", "bv_cf", "wup_cf", "bup_cf",
                 "wo_ctx_cf", "wo_x_cf", "bo_cf")


# ----------------------------- Pallas kernel --------------------------------

def _spatial_ocr_kernel(x_ref, pcl_ref, pcf_ref,
                        wq1_ref, bq1_ref, wq2_ref, bq2_ref,
                        wk1_ref, bk1_ref, wk2_ref, bk2_ref,
                        wv_ref, bv_ref,
                        wup_ref, bup_ref,
                        wo_ctx_ref, wo_x_ref, bo_ref,
                        out_ref):
    cdt = jnp.bfloat16

    x = x_ref[...]        # (C,  Tq)  pixel features of this spatial tile (channels-first)
    p_cl = pcl_ref[...]   # (M,  C )  proxy (object region) features, channels-last
    p_cf = pcf_ref[...]   # (C,  M )  proxy features, channels-first

    def cf_lin_relu(w_ref, a, b_ref):
        # channels-first fused 1x1 conv + BN + ReLU:  relu(W @ a + b)
        y = jnp.dot(w_ref[...], a, preferred_element_type=jnp.float32) + b_ref[...]
        return jnp.maximum(y, 0.0).astype(cdt)

    def cl_lin_relu(a, w_ref, b_ref):
        # channels-last fused 1x1 conv + BN + ReLU:   relu(a @ W + b)
        y = jnp.dot(a, w_ref[...], preferred_element_type=jnp.float32) + b_ref[...]
        return jnp.maximum(y, 0.0).astype(cdt)

    # f_pixel (query): two stages; Kc**-0.5 already folded into wq2/bq2.
    q = cf_lin_relu(wq2_ref, cf_lin_relu(wq1_ref, x, bq1_ref), bq2_ref)    # (Kc, Tq)
    # f_object (key): two stages on the tiny proxy, channels-last.
    k = cl_lin_relu(cl_lin_relu(p_cl, wk1_ref, bk1_ref), wk2_ref, bk2_ref)  # (M, Kc)
    # f_down (value): one stage, channels-first.
    v = cf_lin_relu(wv_ref, p_cf, bv_ref)                                   # (Kc, M)

    # Attention over the M proxy regions (sublane axis); softmax in f32.
    sim = jnp.dot(k, q, preferred_element_type=jnp.float32)                 # (M, Tq)
    sim = sim - jnp.max(sim, axis=0, keepdims=True)
    e = jnp.exp(sim)
    sm = (e * pl.reciprocal(jnp.sum(e, axis=0, keepdims=True), approx=True)
          ).astype(cdt)

    ctx = jnp.dot(v, sm, preferred_element_type=jnp.float32).astype(cdt)    # (Kc, Tq)

    # f_up: back to in_channels (channels-first).
    ctx = cf_lin_relu(wup_ref, ctx, bup_ref)                                # (C, Tq)

    # conv_bn_dropout on concat([context, feats], channel axis) == sum of two
    # matmuls with the split output weight + bias, then ReLU.
    out = (jnp.dot(wo_ctx_ref[...], ctx, preferred_element_type=jnp.float32)
           + jnp.dot(wo_x_ref[...], x, preferred_element_type=jnp.float32)
           + bo_ref[...])
    out_ref[...] = jnp.maximum(out, 0.0).astype(out_ref.dtype)              # (Cout, Tq)


# ------------------------------ wrapper --------------------------------------

def _prepare_kernel_params(params, dtype=jnp.bfloat16):
    """Canonical channels-last fused params -> kernel layouts (+ scale fold, bf16)."""
    Kc = params["wq1"].shape[1]
    s = jnp.float32(Kc) ** -0.5
    cf_w = lambda w: jnp.asarray(w).T            # (Cin, Cout) -> (Cout, Cin)
    cf_b = lambda b: jnp.asarray(b).reshape(-1, 1)
    kp = {
        "wq1_cf": cf_w(params["wq1"]), "bq1_cf": cf_b(params["bq1"]),
        "wq2_cf": cf_w(params["wq2"]) * s, "bq2_cf": cf_b(params["bq2"]) * s,
        "wk1": jnp.asarray(params["wk1"]), "bk1": jnp.asarray(params["bk1"]),
        "wk2": jnp.asarray(params["wk2"]), "bk2": jnp.asarray(params["bk2"]),
        "wv_cf": cf_w(params["wv"]), "bv_cf": cf_b(params["bv"]),
        "wup_cf": cf_w(params["wup"]), "bup_cf": cf_b(params["bup"]),
        "wo_ctx_cf": cf_w(params["wo_ctx"]), "wo_x_cf": cf_w(params["wo_x"]),
        "bo_cf": cf_b(params["bo"]),
    }
    return {n: v.astype(dtype) for n, v in kp.items()}


def spatial_ocr_pallas(feats_nchw, proxy_nchw, params, *, tq=512,
                       vmem_limit_bytes=48 * 1024 * 1024):
    N, C, H, W = feats_nchw.shape
    _, _, Hp, Wp = proxy_nchw.shape
    HW, M = H * W, Hp * Wp

    kp = _prepare_kernel_params(params)
    weights = [kp[n] for n in _WEIGHT_NAMES]
    Cout = kp["bo_cf"].shape[0]

    # Spatial tile: multiple of 128 lanes; pad HW up to a multiple of it.
    tq = max(128, ((min(tq, HW) + 127) // 128) * 128)
    hw_pad = pl.cdiv(HW, tq) * tq
    n_tiles = hw_pad // tq

    # Channels-first, spatially flattened; no transpose of the feature map.
    x = feats_nchw.reshape(N, C, HW).astype(jnp.bfloat16)
    if hw_pad != HW:
        x = jnp.pad(x, ((0, 0), (0, 0), (0, hw_pad - HW)))
    p_cf = proxy_nchw.reshape(N, C, M).astype(jnp.bfloat16)
    p_cl = jnp.transpose(p_cf, (0, 2, 1))   # tiny (M x C) transpose only

    def const_spec(arr):
        nd = arr.ndim
        return pl.BlockSpec(arr.shape, lambda b, j, _nd=nd: (0,) * _nd)

    in_specs = ([pl.BlockSpec((None, C, tq), lambda b, j: (b, 0, j)),
                 pl.BlockSpec((None, M, C), lambda b, j: (b, 0, 0)),
                 pl.BlockSpec((None, C, M), lambda b, j: (b, 0, 0))]
                + [const_spec(w) for w in weights])

    out = pl.pallas_call(
        _spatial_ocr_kernel,
        out_shape=jax.ShapeDtypeStruct((N, Cout, hw_pad), jnp.bfloat16),
        grid=(N, n_tiles),
        in_specs=in_specs,
        out_specs=pl.BlockSpec((None, Cout, tq), lambda b, j: (b, 0, j)),
        compiler_params=pltpu.CompilerParams(
            dimension_semantics=("parallel", "parallel"),
            vmem_limit_bytes=vmem_limit_bytes),
    )(x, p_cl, p_cf, *weights)

    if hw_pad != HW:
        out = out[:, :, :HW]
    return out.reshape(N, Cout, H, W)


# ---------------------- deterministic parameter setup ------------------------

def _fused_conv_bn(key, cin, cout, eps=1e-5):
    """1x1 Conv (no bias) + BatchNorm2d (inference) folded into (W, b), channels-last."""
    kw, kg, kb, km, kv = jax.random.split(key, 5)
    w = jax.random.normal(kw, (cin, cout), jnp.float32) / jnp.sqrt(float(cin))
    gamma = 1.0 + 0.1 * jax.random.normal(kg, (cout,), jnp.float32)
    beta = 0.1 * jax.random.normal(kb, (cout,), jnp.float32)
    mean = 0.1 * jax.random.normal(km, (cout,), jnp.float32)
    var = jnp.abs(jax.random.normal(kv, (cout,), jnp.float32)) + 0.5
    scale = gamma / jnp.sqrt(var + eps)
    w_fused = w * scale[None, :]
    b_fused = (beta - mean * scale)[None, :]         # (1, cout)
    return w_fused, b_fused


def make_params(key, in_channels, key_channels, out_channels):
    ks = jax.random.split(key, 8)
    p = {}
    p["wq1"], p["bq1"] = _fused_conv_bn(ks[0], in_channels, key_channels)
    p["wq2"], p["bq2"] = _fused_conv_bn(ks[1], key_channels, key_channels)
    p["wk1"], p["bk1"] = _fused_conv_bn(ks[2], in_channels, key_channels)
    p["wk2"], p["bk2"] = _fused_conv_bn(ks[3], key_channels, key_channels)
    p["wv"],  p["bv"]  = _fused_conv_bn(ks[4], in_channels, key_channels)
    p["wup"], p["bup"] = _fused_conv_bn(ks[5], key_channels, in_channels)
    wo, bo = _fused_conv_bn(ks[6], 2 * in_channels, out_channels)
    p["wo_ctx"] = wo[:in_channels, :]    # rows acting on context (cat order [context, feats])
    p["wo_x"] = wo[in_channels:, :]      # rows acting on feats
    p["bo"] = bo
    return p


# -------------------------- pure-JAX reference --------------------------------

def spatial_ocr_ref(feats_nchw, proxy_nchw, params):
    """f32 reference on bf16-quantized inputs/weights (matches kernel precision)."""
    rnd = lambda a: jnp.asarray(a).astype(jnp.bfloat16).astype(jnp.float32)
    N, C, H, W = feats_nchw.shape
    _, _, Hp, Wp = proxy_nchw.shape
    HW, M = H * W, Hp * Wp
    Kc = params["wq1"].shape[1]

    x = rnd(jnp.transpose(feats_nchw.reshape(N, C, HW), (0, 2, 1)))
    p = rnd(jnp.transpose(proxy_nchw.reshape(N, C, M), (0, 2, 1)))
    P = {n: rnd(v) for n, v in params.items()}

    def lin_relu(a, w, b):
        return jnp.maximum(a @ w + b, 0.0)

    q = lin_relu(lin_relu(x, P["wq1"], P["bq1"]), P["wq2"], P["bq2"])
    k = lin_relu(lin_relu(p, P["wk1"], P["bk1"]), P["wk2"], P["bk2"])
    v = lin_relu(p, P["wv"], P["bv"])

    sim = jnp.einsum("nqc,nkc->nqk", q, k) * (Kc ** -0.5)
    sm = jax.nn.softmax(sim, axis=-1)
    ctx = jnp.einsum("nqk,nkc->nqc", sm, v)
    ctx = lin_relu(ctx, P["wup"], P["bup"])

    out = jnp.maximum(ctx @ P["wo_ctx"] + x @ P["wo_x"] + P["bo"], 0.0)
    Cout = out.shape[-1]
    return jnp.transpose(out, (0, 2, 1)).reshape(N, Cout, H, W)


# --------------------------------- main ---------------------------------------

if __name__ == "__main__":
    key = jax.random.PRNGKey(0)
    k_feat, k_proxy, k_params = jax.random.split(key, 3)

    # Small shapes consistent with the module: N x C x H x W pixel features and
    # N x C x M x 1 object-region (proxy) features.
    N, C, H, W = 2, 32, 16, 16
    Kc, Cout = 16, 32
    M = 8

    feats = jax.random.normal(k_feat, (N, C, H, W), jnp.float32)
    proxy_feats = jax.random.normal(k_proxy, (N, C, M, 1), jnp.float32)
    params = make_params(k_params, C, Kc, Cout)

    # tq=128 exercises the (batch x spatial-tile) grid: grid = (2, 2).
    out = spatial_ocr_pallas(feats, proxy_feats, params, tq=128)
    out = jax.block_until_ready(out).astype(jnp.float32)

    ref = spatial_ocr_ref(feats, proxy_feats, params)
    assert out.shape == (N, Cout, H, W), out.shape
    max_err = jnp.max(jnp.abs(out - ref))
    assert jnp.allclose(out, ref, atol=5e-2, rtol=5e-2), \
        f"max abs err = {max_err}"

    print("KERNEL_OK")
</pallas_src>

<mosaic_0001>
module attributes {stable_mosaic.version = 11 : i64} {
  func.func @_spatial_ocr_kernel(%arg0: i32, %arg1: i32, %arg2: memref<1x32x128xbf16, #tpu.memory_space<vmem>>, %arg3: memref<1x8x32xbf16, #tpu.memory_space<vmem>>, %arg4: memref<1x32x8xbf16, #tpu.memory_space<vmem>>, %arg5: memref<16x32xbf16, #tpu.memory_space<vmem>>, %arg6: memref<16x1xbf16, #tpu.memory_space<vmem>>, %arg7: memref<16x16xbf16, #tpu.memory_space<vmem>>, %arg8: memref<16x1xbf16, #tpu.memory_space<vmem>>, %arg9: memref<32x16xbf16, #tpu.memory_space<vmem>>, %arg10: memref<1x16xbf16, #tpu.memory_space<vmem>>, %arg11: memref<16x16xbf16, #tpu.memory_space<vmem>>, %arg12: memref<1x16xbf16, #tpu.memory_space<vmem>>, %arg13: memref<16x32xbf16, #tpu.memory_space<vmem>>, %arg14: memref<16x1xbf16, #tpu.memory_space<vmem>>, %arg15: memref<32x16xbf16, #tpu.memory_space<vmem>>, %arg16: memref<32x1xbf16, #tpu.memory_space<vmem>>, %arg17: memref<32x32xbf16, #tpu.memory_space<vmem>>, %arg18: memref<32x32xbf16, #tpu.memory_space<vmem>>, %arg19: memref<32x1xbf16, #tpu.memory_space<vmem>>, %arg20: memref<1x32x128xbf16, #tpu.memory_space<vmem>>) attributes {dimension_semantics = [#tpu.dimension_semantics<parallel>, #tpu.dimension_semantics<parallel>], iteration_bounds = array<i64: 2, 2>, scalar_prefetch = 0 : i64, scratch_operands = 0 : i64, tpu.core_type = #tpu.core_type<tc>, window_params = [{transform_indices = @transform_0, window_bounds = array<i64: 1, 32, 128>}, {transform_indices = @transform_1, window_bounds = array<i64: 1, 8, 32>}, {transform_indices = @transform_2, window_bounds = array<i64: 1, 32, 8>}, {pipeline_mode = #tpu.pipeline_mode<synchronous>, transform_indices = @transform_3, window_bounds = array<i64: 16, 32>}, {pipeline_mode = #tpu.pipeline_mode<synchronous>, transform_indices = @transform_4, window_bounds = array<i64: 16, 1>}, {pipeline_mode = #tpu.pipeline_mode<synchronous>, transform_indices = @transform_5, window_bounds = array<i64: 16, 16>}, {pipeline_mode = #tpu.pipeline_mode<synchronous>, transform_indices = @transform_6, window_bounds = array<i64: 16, 1>}, {pipeline_mode = #tpu.pipeline_mode<synchronous>, transform_indices = @transform_7, window_bounds = array<i64: 32, 16>}, {pipeline_mode = #tpu.pipeline_mode<synchronous>, transform_indices = @transform_8, window_bounds = array<i64: 1, 16>}, {pipeline_mode = #tpu.pipeline_mode<synchronous>, transform_indices = @transform_9, window_bounds = array<i64: 16, 16>}, {pipeline_mode = #tpu.pipeline_mode<synchronous>, transform_indices = @transform_10, window_bounds = array<i64: 1, 16>}, {pipeline_mode = #tpu.pipeline_mode<synchronous>, transform_indices = @transform_11, window_bounds = array<i64: 16, 32>}, {pipeline_mode = #tpu.pipeline_mode<synchronous>, transform_indices = @transform_12, window_bounds = array<i64: 16, 1>}, {pipeline_mode = #tpu.pipeline_mode<synchronous>, transform_indices = @transform_13, window_bounds = array<i64: 32, 16>}, {pipeline_mode = #tpu.pipeline_mode<synchronous>, transform_indices = @transform_14, window_bounds = array<i64: 32, 1>}, {pipeline_mode = #tpu.pipeline_mode<synchronous>, transform_indices = @transform_15, window_bounds = array<i64: 32, 32>}, {pipeline_mode = #tpu.pipeline_mode<synchronous>, transform_indices = @transform_16, window_bounds = array<i64: 32, 32>}, {pipeline_mode = #tpu.pipeline_mode<synchronous>, transform_indices = @transform_17, window_bounds = array<i64: 32, 1>}, {transform_indices = @transform_18, window_bounds = array<i64: 1, 32, 128>}]} {
    %c0 = arith.constant 0 : index
    %c0_0 = arith.constant 0 : index
    %c0_1 = arith.constant 0 : index
    %0 = vector.load %arg2[%c0, %c0_0, %c0_1] : memref<1x32x128xbf16, #tpu.memory_space<vmem>>, vector<1x32x128xbf16>
    %1 = vector.shape_cast %0 : vector<1x32x128xbf16> to vector<32x128xbf16>
    %c0_2 = arith.constant 0 : index
    %c0_3 = arith.constant 0 : index
    %c0_4 = arith.constant 0 : index
    %2 = vector.load %arg3[%c0_2, %c0_3, %c0_4] : memref<1x8x32xbf16, #tpu.memory_space<vmem>>, vector<1x8x32xbf16>
    %3 = vector.shape_cast %2 : vector<1x8x32xbf16> to vector<8x32xbf16>
    %c0_5 = arith.constant 0 : index
    %c0_6 = arith.constant 0 : index
    %c0_7 = arith.constant 0 : index
    %4 = vector.load %arg4[%c0_5, %c0_6, %c0_7] : memref<1x32x8xbf16, #tpu.memory_space<vmem>>, vector<1x32x8xbf16>
    %5 = vector.shape_cast %4 : vector<1x32x8xbf16> to vector<32x8xbf16>
    %c0_8 = arith.constant 0 : index
    %c0_9 = arith.constant 0 : index
    %6 = vector.load %arg5[%c0_8, %c0_9] : memref<16x32xbf16, #tpu.memory_space<vmem>>, vector<16x32xbf16>
    %cst = arith.constant dense<0.000000e+00> : vector<16x128xf32>
    %7 = tpu.matmul %6, %1, %cst {dimension_numbers = #tpu.dot_dimension_numbers<[1], [0], [0], [1], [0, 0, 1, 1], [], []>} : vector<16x32xbf16>, vector<32x128xbf16>, vector<16x128xf32> -> vector<16x128xf32>
    %c0_10 = arith.constant 0 : index
    %c0_11 = arith.constant 0 : index
    %8 = vector.load %arg6[%c0_10, %c0_11] : memref<16x1xbf16, #tpu.memory_space<vmem>>, vector<16x1xbf16>
    %9 = arith.extf %8 : vector<16x1xbf16> to vector<16x1xf32>
    %10 = vector.broadcast %9 : vector<16x1xf32> to vector<16x128xf32>
    %11 = arith.addf %7, %10 : vector<16x128xf32>
    %cst_12 = arith.constant 0.000000e+00 : f32
    %12 = vector.broadcast %cst_12 : f32 to vector<16x128xf32>
    %13 = arith.maximumf %11, %12 : vector<16x128xf32>
    %14 = arith.truncf %13 : vector<16x128xf32> to vector<16x128xbf16>
    %c0_13 = arith.constant 0 : index
    %c0_14 = arith.constant 0 : index
    %15 = vector.load %arg7[%c0_13, %c0_14] : memref<16x16xbf16, #tpu.memory_space<vmem>>, vector<16x16xbf16>
    %cst_15 = arith.constant dense<0.000000e+00> : vector<16x128xf32>
    %16 = tpu.matmul %15, %14, %cst_15 {dimension_numbers = #tpu.dot_dimension_numbers<[1], [0], [0], [1], [0, 0, 1, 1], [], []>} : vector<16x16xbf16>, vector<16x128xbf16>, vector<16x128xf32> -> vector<16x128xf32>
    %c0_16 = arith.constant 0 : index
    %c0_17 = arith.constant 0 : index
    %17 = vector.load %arg8[%c0_16, %c0_17] : memref<16x1xbf16, #tpu.memory_space<vmem>>, vector<16x1xbf16>
    %18 = arith.extf %17 : vector<16x1xbf16> to vector<16x1xf32>
    %19 = vector.broadcast %18 : vector<16x1xf32> to vector<16x128xf32>
    %20 = arith.addf %16, %19 : vector<16x128xf32>
    %cst_18 = arith.constant 0.000000e+00 : f32
    %21 = vector.broadcast %cst_18 : f32 to vector<16x128xf32>
    %22 = arith.maximumf %20, %21 : vector<16x128xf32>
    %23 = arith.truncf %22 : vector<16x128xf32> to vector<16x128xbf16>
    %c0_19 = arith.constant 0 : index
    %c0_20 = arith.constant 0 : index
    %24 = vector.load %arg9[%c0_19, %c0_20] : memref<32x16xbf16, #tpu.memory_space<vmem>>, vector<32x16xbf16>
    %cst_21 = arith.constant dense<0.000000e+00> : vector<8x16xf32>
    %25 = tpu.matmul %3, %24, %cst_21 {dimension_numbers = #tpu.dot_dimension_numbers<[1], [0], [0], [1], [0, 0, 1, 1], [], []>} : vector<8x32xbf16>, vector<32x16xbf16>, vector<8x16xf32> -> vector<8x16xf32>
    %c0_22 = arith.constant 0 : index
    %c0_23 = arith.constant 0 : index
    %26 = vector.load %arg10[%c0_22, %c0_23] : memref<1x16xbf16, #tpu.memory_space<vmem>>, vector<1x16xbf16>
    %27 = arith.extf %26 : vector<1x16xbf16> to vector<1x16xf32>
    %28 = vector.broadcast %27 : vector<1x16xf32> to vector<8x16xf32>
    %29 = arith.addf %25, %28 : vector<8x16xf32>
    %cst_24 = arith.constant 0.000000e+00 : f32
    %30 = vector.broadcast %cst_24 : f32 to vector<8x16xf32>
    %31 = arith.maximumf %29, %30 : vector<8x16xf32>
    %32 = arith.truncf %31 : vector<8x16xf32> to vector<8x16xbf16>
    %c0_25 = arith.constant 0 : index
    %c0_26 = arith.constant 0 : index
    %33 = vector.load %arg11[%c0_25, %c0_26] : memref<16x16xbf16, #tpu.memory_space<vmem>>, vector<16x16xbf16>
    %cst_27 = arith.constant dense<0.000000e+00> : vector<8x16xf32>
    %34 = tpu.matmul %32, %33, %cst_27 {dimension_numbers = #tpu.dot_dimension_numbers<[1], [0], [0], [1], [0, 0, 1, 1], [], []>} : vector<8x16xbf16>, vector<16x16xbf16>, vector<8x16xf32> -> vector<8x16xf32>
    %c0_28 = arith.constant 0 : index
    %c0_29 = arith.constant 0 : index
    %35 = vector.load %arg12[%c0_28, %c0_29] : memref<1x16xbf16, #tpu.memory_space<vmem>>, vector<1x16xbf16>
    %36 = arith.extf %35 : vector<1x16xbf16> to vector<1x16xf32>
    %37 = vector.broadcast %36 : vector<1x16xf32> to vector<8x16xf32>
    %38 = arith.addf %34, %37 : vector<8x16xf32>
    %cst_30 = arith.constant 0.000000e+00 : f32
    %39 = vector.broadcast %cst_30 : f32 to vector<8x16xf32>
    %40 = arith.maximumf %38, %39 : vector<8x16xf32>
    %41 = arith.truncf %40 : vector<8x16xf32> to vector<8x16xbf16>
    %c0_31 = arith.constant 0 : index
    %c0_32 = arith.constant 0 : index
    %42 = vector.load %arg13[%c0_31, %c0_32] : memref<16x32xbf16, #tpu.memory_space<vmem>>, vector<16x32xbf16>
    %cst_33 = arith.constant dense<0.000000e+00> : vector<16x8xf32>
    %43 = tpu.matmul %42, %5, %cst_33 {dimension_numbers = #tpu.dot_dimension_numbers<[1], [0], [0], [1], [0, 0, 1, 1], [], []>} : vector<16x32xbf16>, vector<32x8xbf16>, vector<16x8xf32> -> vector<16x8xf32>
    %c0_34 = arith.constant 0 : index
    %c0_35 = arith.constant 0 : index
    %44 = vector.load %arg14[%c0_34, %c0_35] : memref<16x1xbf16, #tpu.memory_space<vmem>>, vector<16x1xbf16>
    %45 = arith.extf %44 : vector<16x1xbf16> to vector<16x1xf32>
    %46 = vector.broadcast %45 : vector<16x1xf32> to vector<16x8xf32>
    %47 = arith.addf %43, %46 : vector<16x8xf32>
    %cst_36 = arith.constant 0.000000e+00 : f32
    %48 = vector.broadcast %cst_36 : f32 to vector<16x8xf32>
    %49 = arith.maximumf %47, %48 : vector<16x8xf32>
    %50 = arith.truncf %49 : vector<16x8xf32> to vector<16x8xbf16>
    %cst_37 = arith.constant dense<0.000000e+00> : vector<8x128xf32>
    %51 = tpu.matmul %41, %23, %cst_37 {dimension_numbers = #tpu.dot_dimension_numbers<[1], [0], [0], [1], [0, 0, 1, 1], [], []>} : vector<8x16xbf16>, vector<16x128xbf16>, vector<8x128xf32> -> vector<8x128xf32>
    %cst_38 = arith.constant dense<0xFF800000> : vector<128xf32>
    %52 = vector.multi_reduction <maximumf>, %51, %cst_38 [0] : vector<8x128xf32> to vector<128xf32>
    %53 = vector.shape_cast %52 : vector<128xf32> to vector<1x128xf32>
    %54 = vector.broadcast %53 : vector<1x128xf32> to vector<8x128xf32>
    %55 = arith.subf %51, %54 : vector<8x128xf32>
    %56 = math.exp %55 : vector<8x128xf32>
    %cst_39 = arith.constant dense<0.000000e+00> : vector<128xf32>
    %57 = vector.multi_reduction <add>, %56, %cst_39 [0] : vector<8x128xf32> to vector<128xf32>
    %58 = vector.shape_cast %57 : vector<128xf32> to vector<1x128xf32>
    %59 = tpu.reciprocal %58 {approx = true} : vector<1x128xf32> -> vector<1x128xf32>
    %60 = vector.broadcast %59 : vector<1x128xf32> to vector<8x128xf32>
    %61 = arith.mulf %56, %60 : vector<8x128xf32>
    %62 = arith.truncf %61 : vector<8x128xf32> to vector<8x128xbf16>
    %cst_40 = arith.constant dense<0.000000e+00> : vector<16x128xf32>
    %63 = tpu.matmul %50, %62, %cst_40 {dimension_numbers = #tpu.dot_dimension_numbers<[1], [0], [0], [1], [0, 0, 1, 1], [], []>} : vector<16x8xbf16>, vector<8x128xbf16>, vector<16x128xf32> -> vector<16x128xf32>
    %64 = arith.truncf %63 : vector<16x128xf32> to vector<16x128xbf16>
    %c0_41 = arith.constant 0 : index
    %c0_42 = arith.constant 0 : index
    %65 = vector.load %arg15[%c0_41, %c0_42] : memref<32x16xbf16, #tpu.memory_space<vmem>>, vector<32x16xbf16>
    %cst_43 = arith.constant dense<0.000000e+00> : vector<32x128xf32>
    %66 = tpu.matmul %65, %64, %cst_43 {dimension_numbers = #tpu.dot_dimension_numbers<[1], [0], [0], [1], [0, 0, 1, 1], [], []>} : vector<32x16xbf16>, vector<16x128xbf16>, vector<32x128xf32> -> vector<32x128xf32>
    %c0_44 = arith.constant 0 : index
    %c0_45 = arith.constant 0 : index
    %67 = vector.load %arg16[%c0_44, %c0_45] : memref<32x1xbf16, #tpu.memory_space<vmem>>, vector<32x1xbf16>
    %68 = arith.extf %67 : vector<32x1xbf16> to vector<32x1xf32>
    %69 = vector.broadcast %68 : vector<32x1xf32> to vector<32x128xf32>
    %70 = arith.addf %66, %69 : vector<32x128xf32>
    %cst_46 = arith.constant 0.000000e+00 : f32
    %71 = vector.broadcast %cst_46 : f32 to vector<32x128xf32>
    %72 = arith.maximumf %70, %71 : vector<32x128xf32>
    %73 = arith.truncf %72 : vector<32x128xf32> to vector<32x128xbf16>
    %c0_47 = arith.constant 0 : index
    %c0_48 = arith.constant 0 : index
    %74 = vector.load %arg17[%c0_47, %c0_48] : memref<32x32xbf16, #tpu.memory_space<vmem>>, vector<32x32xbf16>
    %cst_49 = arith.constant dense<0.000000e+00> : vector<32x128xf32>
    %75 = tpu.matmul %74, %73, %cst_49 {dimension_numbers = #tpu.dot_dimension_numbers<[1], [0], [0], [1], [0, 0, 1, 1], [], []>} : vector<32x32xbf16>, vector<32x128xbf16>, vector<32x128xf32> -> vector<32x128xf32>
    %c0_50 = arith.constant 0 : index
    %c0_51 = arith.constant 0 : index
    %76 = vector.load %arg18[%c0_50, %c0_51] : memref<32x32xbf16, #tpu.memory_space<vmem>>, vector<32x32xbf16>
    %cst_52 = arith.constant dense<0.000000e+00> : vector<32x128xf32>
    %77 = tpu.matmul %76, %1, %cst_52 {dimension_numbers = #tpu.dot_dimension_numbers<[1], [0], [0], [1], [0, 0, 1, 1], [], []>} : vector<32x32xbf16>, vector<32x128xbf16>, vector<32x128xf32> -> vector<32x128xf32>
    %78 = arith.addf %75, %77 : vector<32x128xf32>
    %c0_53 = arith.constant 0 : index
    %c0_54 = arith.constant 0 : index
    %79 = vector.load %arg19[%c0_53, %c0_54] : memref<32x1xbf16, #tpu.memory_space<vmem>>, vector<32x1xbf16>
    %80 = arith.extf %79 : vector<32x1xbf16> to vector<32x1xf32>
    %81 = vector.broadcast %80 : vector<32x1xf32> to vector<32x128xf32>
    %82 = arith.addf %78, %81 : vector<32x128xf32>
    %cst_55 = arith.constant 0.000000e+00 : f32
    %83 = vector.broadcast %cst_55 : f32 to vector<32x128xf32>
    %84 = arith.maximumf %82, %83 : vector<32x128xf32>
    %85 = arith.truncf %84 : vector<32x128xf32> to vector<32x128xbf16>
    %c0_56 = arith.constant 0 : index
    %c0_57 = arith.constant 0 : index
    %c0_58 = arith.constant 0 : index
    %86 = vector.load %arg20[%c0_56, %c0_57, %c0_58] : memref<1x32x128xbf16, #tpu.memory_space<vmem>>, vector<1x32x128xbf16>
    %87 = vector.shape_cast %86 : vector<1x32x128xbf16> to vector<32x128xbf16>
    %88 = vector.shape_cast %85 : vector<32x128xbf16> to vector<1x32x128xbf16>
    tpu.vector_store %arg20[%c0_56, %c0_57, %c0_58], %88 {strides = array<i32>} : memref<1x32x128xbf16, #tpu.memory_space<vmem>>, vector<1x32x128xbf16>,
    return
  }
  func.func @transform_0(%arg0: i32, %arg1: i32) -> (i32, i32, i32) {
    %c0_i32 = arith.constant 0 : i32
    %c0_i32_0 = arith.constant 0 : i32
    return %arg0, %c0_i32, %arg1 : i32, i32, i32
  }
  func.func @transform_1(%arg0: i32, %arg1: i32) -> (i32, i32, i32) {
    %c0_i32 = arith.constant 0 : i32
    %c0_i32_0 = arith.constant 0 : i32
    %c0_i32_1 = arith.constant 0 : i32
    return %arg0, %c0_i32, %c0_i32_0 : i32, i32, i32
  }
  func.func @transform_2(%arg0: i32, %arg1: i32) -> (i32, i32, i32) {
    %c0_i32 = arith.constant 0 : i32
    %c0_i32_0 = arith.constant 0 : i32
    %c0_i32_1 = arith.constant 0 : i32
    return %arg0, %c0_i32, %c0_i32_0 : i32, i32, i32
  }
  func.func @transform_3(%arg0: i32, %arg1: i32) -> (i32, i32) {
    %c0_i32 = arith.constant 0 : i32
    %c0_i32_0 = arith.constant 0 : i32
    %c0_i32_1 = arith.constant 0 : i32
    return %c0_i32, %c0_i32_0 : i32, i32
  }
  func.func @transform_4(%arg0: i32, %arg1: i32) -> (i32, i32) {
    %c0_i32 = arith.constant 0 : i32
    %c0_i32_0 = arith.constant 0 : i32
    %c0_i32_1 = arith.constant 0 : i32
    return %c0_i32, %c0_i32_0 : i32, i32
  }
  func.func @transform_5(%arg0: i32, %arg1: i32) -> (i32, i32) {
    %c0_i32 = arith.constant 0 : i32
    %c0_i32_0 = arith.constant 0 : i32
    %c0_i32_1 = arith.constant 0 : i32
    return %c0_i32, %c0_i32_0 : i32, i32
  }
  func.func @transform_6(%arg0: i32, %arg1: i32) -> (i32, i32) {
    %c0_i32 = arith.constant 0 : i32
    %c0_i32_0 = arith.constant 0 : i32
    %c0_i32_1 = arith.constant 0 : i32
    return %c0_i32, %c0_i32_0 : i32, i32
  }
  func.func @transform_7(%arg0: i32, %arg1: i32) -> (i32, i32) {
    %c0_i32 = arith.constant 0 : i32
    %c0_i32_0 = arith.constant 0 : i32
    %c0_i32_1 = arith.constant 0 : i32
    return %c0_i32, %c0_i32_0 : i32, i32
  }
  func.func @transform_8(%arg0: i32, %arg1: i32) -> (i32, i32) {
    %c0_i32 = arith.constant 0 : i32
    %c0_i32_0 = arith.constant 0 : i32
    %c0_i32_1 = arith.constant 0 : i32
    return %c0_i32, %c0_i32_0 : i32, i32
  }
  func.func @transform_9(%arg0: i32, %arg1: i32) -> (i32, i32) {
    %c0_i32 = arith.constant 0 : i32
    %c0_i32_0 = arith.constant 0 : i32
    %c0_i32_1 = arith.constant 0 : i32
    return %c0_i32, %c0_i32_0 : i32, i32
  }
  func.func @transform_10(%arg0: i32, %arg1: i32) -> (i32, i32) {
    %c0_i32 = arith.constant 0 : i32
    %c0_i32_0 = arith.constant 0 : i32
    %c0_i32_1 = arith.constant 0 : i32
    return %c0_i32, %c0_i32_0 : i32, i32
  }
  func.func @transform_11(%arg0: i32, %arg1: i32) -> (i32, i32) {
    %c0_i32 = arith.constant 0 : i32
    %c0_i32_0 = arith.constant 0 : i32
    %c0_i32_1 = arith.constant 0 : i32
    return %c0_i32, %c0_i32_0 : i32, i32
  }
  func.func @transform_12(%arg0: i32, %arg1: i32) -> (i32, i32) {
    %c0_i32 = arith.constant 0 : i32
    %c0_i32_0 = arith.constant 0 : i32
    %c0_i32_1 = arith.constant 0 : i32
    return %c0_i32, %c0_i32_0 : i32, i32
  }
  func.func @transform_13(%arg0: i32, %arg1: i32) -> (i32, i32) {
    %c0_i32 = arith.constant 0 : i32
    %c0_i32_0 = arith.constant 0 : i32
    %c0_i32_1 = arith.constant 0 : i32
    return %c0_i32, %c0_i32_0 : i32, i32
  }
  func.func @transform_14(%arg0: i32, %arg1: i32) -> (i32, i32) {
    %c0_i32 = arith.constant 0 : i32
    %c0_i32_0 = arith.constant 0 : i32
    %c0_i32_1 = arith.constant 0 : i32
    return %c0_i32, %c0_i32_0 : i32, i32
  }
  func.func @transform_15(%arg0: i32, %arg1: i32) -> (i32, i32) {
    %c0_i32 = arith.constant 0 : i32
    %c0_i32_0 = arith.constant 0 : i32
    %c0_i32_1 = arith.constant 0 : i32
    return %c0_i32, %c0_i32_0 : i32, i32
  }
  func.func @transform_16(%arg0: i32, %arg1: i32) -> (i32, i32) {
    %c0_i32 = arith.constant 0 : i32
    %c0_i32_0 = arith.constant 0 : i32
    %c0_i32_1 = arith.constant 0 : i32
    return %c0_i32, %c0_i32_0 : i32, i32
  }
  func.func @transform_17(%arg0: i32, %arg1: i32) -> (i32, i32) {
    %c0_i32 = arith.constant 0 : i32
    %c0_i32_0 = arith.constant 0 : i32
    %c0_i32_1 = arith.constant 0 : i32
    return %c0_i32, %c0_i32_0 : i32, i32
  }
  func.func @transform_18(%arg0: i32, %arg1: i32) -> (i32, i32, i32) {
    %c0_i32 = arith.constant 0 : i32
    %c0_i32_0 = arith.constant 0 : i32
    return %arg0, %c0_i32, %arg1 : i32, i32, i32
  }
}

</mosaic_0001>

<llo_original>
// kernel: tpu_custom_call.1
$region0: #{tpu_custom_call.1}
  #allocation0 [shape = 'u32[]', space=smem, size = 0x4, offset = 0x4, fixed_abs, tag = 'smem constant byte address 0x4 - core index']
  #allocation1 [shape = 'u32[144,128]{1,0:T(1,128)}', space=vmem, size = 0x12000, scoped, tag = 'internal scratch']
  %s0 = inlined_call_operand.vmem [shape: bf16[2,32,256], index: 0, kind: input, shape index: {}]
  %s1 = inlined_call_operand.vmem [shape: bf16[2,8,32], index: 1, kind: input, shape index: {}]
  %s2 = inlined_call_operand.vmem [shape: bf16[2,32,8], index: 2, kind: input, shape index: {}]
  %s3 = inlined_call_operand.vmem [shape: bf16[16,32], index: 3, kind: input, shape index: {}]
  %s4 = inlined_call_operand.vmem [shape: bf16[16,1], index: 4, kind: input, shape index: {}]
  %s5 = inlined_call_operand.vmem [shape: bf16[16,16], index: 5, kind: input, shape index: {}]
  %s6 = inlined_call_operand.vmem [shape: bf16[16,1], index: 6, kind: input, shape index: {}]
  %s7 = inlined_call_operand.vmem [shape: bf16[32,16], index: 7, kind: input, shape index: {}]
  %s8 = inlined_call_operand.hbm [shape: bf16[1,16], index: 8, kind: input, shape index: {}]
  %s9 = inlined_call_operand.vmem [shape: bf16[16,16], index: 9, kind: input, shape index: {}]
  %s10 = inlined_call_operand.vmem [shape: bf16[1,16], index: 10, kind: input, shape index: {}]
  %s11 = inlined_call_operand.vmem [shape: bf16[16,32], index: 11, kind: input, shape index: {}]
  %s12 = inlined_call_operand.vmem [shape: bf16[16,1], index: 12, kind: input, shape index: {}]
  %s13 = inlined_call_operand.vmem [shape: bf16[32,16], index: 13, kind: input, shape index: {}]
  %s14 = inlined_call_operand.vmem [shape: bf16[32,1], index: 14, kind: input, shape index: {}]
  %s15 = inlined_call_operand.vmem [shape: bf16[32,32], index: 15, kind: input, shape index: {}]
  %s16 = inlined_call_operand.vmem [shape: bf16[32,32], index: 16, kind: input, shape index: {}]
  %s17 = inlined_call_operand.vmem [shape: bf16[32,1], index: 17, kind: input, shape index: {}]
  %s18 = inlined_call_operand.hbm [shape: bf16[2,32,256], index: 18, kind: output, shape index: {}]
  %s19 = sld [smem:[#allocation0]]
  $region150: #{tpu_custom_call.1} parent=0
    _
  %s21 = ssub.s32 1, %s19
  %s22 = scalar_select 0, %s21, %s19
  $region1: #{tpu_custom_call.1} parent=0
    #allocation2 [shape = 'u8[16384]{0}', space=vmem, size = 0x4000, scoped, tag = 'input window, operand 0']
    #allocation3 [shape = 'u8[512]{0}', space=vmem, size = 0x400, scoped, tag = 'input window, operand 8, single buffered']
    #allocation4 [shape = 's32[2]{0}', space=sflag, size = 0x8, scoped, tag = 'scoped memory for tpu_custom_call.1']
    #allocation5 [shape = 's32[2]{0}', space=sflag, size = 0x8, scoped, tag = 'scoped memory for tpu_custom_call.1']
    #allocation6 [shape = 'u8[16384]{0}', space=vmem, size = 0x4000, scoped, tag = 'output window, operand 0']
    %23 = vsyncpa [#allocation4], 0
    %24 = vsyncpa [#allocation5], 0
    %s25 = scalar_lea.sflag [#allocation5], 1
    %26 = vsyncpa %s25, 0
    loop: start=0, step=1, limit=6
    $region2: #{tpu_custom_call.1} parent=1 // loop_pre_header
      _
    $region3: #{tpu_custom_call.1} parent=1 // loop_header
      %s28 = sphi 0, %s32
      %p29 = scmp.ge.s32.totalorder %s28, 6
      %s35 = sphi 0, %s47
      %s36 = sphi 0, %s43
      %s37 = sphi 0, %s35
      %s38 = sphi 0, %s36
      %s39 = sphi 0, %s37
      %s40 = sphi 0, %s38
      %s52 = sphi 0, %s54
      %s55 = sphi 0, %s52
      %s56 = sphi 0, %s55
      %s72 = sphi 0, %s56
      %s78 = sphi 0, %s80
      %s81 = sphi 0, %s78
      %s82 = sphi 0, %s81
      %s98 = sphi 0, %s82
      %s104 = sphi 0, %s106
      %s107 = sphi 0, %s104
      %s108 = sphi 0, %s107
      %s124 = sphi 0, %s108
      %s128 = sphi 0, %s128
      %s130 = sphi 0, %s128
      %s131 = sphi 0, %s130
      %s145 = sphi 0, %s131
      %s149 = sphi 0, %s149
      %s151 = sphi 0, %s149
      %s152 = sphi 0, %s151
      %s166 = sphi 0, %s152
      %s170 = sphi 0, %s170
      %s172 = sphi 0, %s170
      %s173 = sphi 0, %s172
      %s187 = sphi 0, %s173
      %s191 = sphi 0, %s191
      %s193 = sphi 0, %s191
      %s194 = sphi 0, %s193
      %s208 = sphi 0, %s194
      %s212 = sphi 0, %s212
      %s214 = sphi 0, %s212
      %s215 = sphi 0, %s214
      %s229 = sphi 0, %s215
      %s233 = sphi 0, %s233
      %s235 = sphi 0, %s233
      %s236 = sphi 0, %s235
      %s250 = sphi 0, %s236
      %s254 = sphi 0, %s254
      %s256 = sphi 0, %s254
      %s257 = sphi 0, %s256
      %s271 = sphi 0, %s257
      %s275 = sphi 0, %s275
      %s277 = sphi 0, %s275
      %s278 = sphi 0, %s277
      %s292 = sphi 0, %s278
      %s296 = sphi 0, %s296
      %s298 = sphi 0, %s296
      %s299 = sphi 0, %s298
      %s313 = sphi 0, %s299
      %s317 = sphi 0, %s317
      %s319 = sphi 0, %s317
      %s320 = sphi 0, %s319
      %s334 = sphi 0, %s320
      %s338 = sphi 0, %s338
      %s340 = sphi 0, %s338
      %s341 = sphi 0, %s340
      %s355 = sphi 0, %s341
      %s359 = sphi 0, %s359
      %s361 = sphi 0, %s359
      %s362 = sphi 0, %s361
      %s376 = sphi 0, %s362
      %s380 = sphi 0, %s380
      %s382 = sphi 0, %s380
      %s383 = sphi 0, %s382
      %s397 = sphi 0, %s383
      %s401 = sphi 0, %s401
      %s403 = sphi 0, %s401
      %s404 = sphi 0, %s403
      %s418 = sphi 0, %s404
      %s422 = sphi 0, %s422
      %s424 = sphi 0, %s422
      %s425 = sphi 0, %s424
      %s439 = sphi 0, %s425
      %s447 = sphi 0, %s449
      %s450 = sphi 0, %s447
      %s451 = sphi 0, %s450
      %s467 = sphi 0, %s451
    $region4: #{tpu_custom_call.1} parent=1 // loop_header_branch
      %31 = sbr.rel (%p29) target = $region8
    $region5: #{tpu_custom_call.1} parent=1 // loop_body
      %s33 = ssub.s32 %s28, 1
      %s34 = ssub.s32 %s28, 2
      %s41 = sadd.s32 1, %s36
      %p42 = scmp.ge.s32.totalorder %s41, 2
      %s43 = scalar_select %p42, 0, %s41
      %s44 = sadd.s32 1, %s35
      %s45 = scalar_select %p42, %s44, %s35
      %p46 = scmp.ge.s32.totalorder %s45, 2
      %s47 = scalar_select %p46, 0, %s45
      %s48 = ssub.s32 %s35, %s47
      %s49 = ssub.s32 %s36, %s43
      %s50 = sor.u32 %s48, %s49
      %p51 = scmp.eq.s32.totalorder %s50, 0
      %s53 = sadd.s32 %s52, 1
      %s54 = scalar_select %p51, %s52, %s53
      %p57 = pneg %p51
      %p58 = scmp.eq.s32.totalorder %s28, 3
      %p59 = por %p57, %p58
      %p60 = scmp.ne.s32.totalorder %s52, %s55
      %p61 = scmp.eq.s32.totalorder %s28, 0
      %p62 = por %p60, %p61
      %p63 = scmp.ne.s32.totalorder %s52, %s55
      %p64 = scmp.eq.s32.totalorder %s33, 3
      %p65 = por %p63, %p64
      %p66 = scmp.ne.s32.totalorder %s55, %s56
      %p67 = scmp.eq.s32.totalorder %s33, 0
      %p68 = por %p66, %p67
      %p69 = scmp.ne.s32.totalorder %s55, %s56
      %p70 = scmp.eq.s32.totalorder %s34, 3
      %p71 = por %p69, %p70
      %p73 = scmp.ne.s32.totalorder %s56, %s72
      %p74 = scmp.eq.s32.totalorder %s34, 0
      %p75 = por %p73, %p74
      %s76 = ssub.s32 %s35, %s47
      %p77 = scmp.eq.s32.totalorder %s76, 0
      %s79 = sadd.s32 %s78, 1
      %s80 = scalar_select %p77, %s78, %s79
      %p83 = pneg %p77
      %p84 = scmp.eq.s32.totalorder %s28, 3
      %p85 = por %p83, %p84
      %p86 = scmp.ne.s32.totalorder %s78, %s81
      %p87 = scmp.eq.s32.totalorder %s28, 0
      %p88 = por %p86, %p87
      %p89 = scmp.ne.s32.totalorder %s78, %s81
      %p90 = scmp.eq.s32.totalorder %s33, 3
      %p91 = por %p89, %p90
      %p92 = scmp.ne.s32.totalorder %s81, %s82
      %p93 = scmp.eq.s32.totalorder %s33, 0
      %p94 = por %p92, %p93
      %p95 = scmp.ne.s32.totalorder %s81, %s82
      %p96 = scmp.eq.s32.totalorder %s34, 3
      %p97 = por %p95, %p96
      %p99 = scmp.ne.s32.totalorder %s82, %s98
      %p100 = scmp.eq.s32.totalorder %s34, 0
      %p101 = por %p99, %p100
      %s102 = ssub.s32 %s35, %s47
      %p103 = scmp.eq.s32.totalorder %s102, 0
      %s105 = sadd.s32 %s104, 1
      %s106 = scalar_select %p103, %s104, %s105
      %p109 = pneg %p103
      %p110 = scmp.eq.s32.totalorder %s28, 3
      %p111 = por %p109, %p110
      %p112 = scmp.ne.s32.totalorder %s104, %s107
      %p113 = scmp.eq.s32.totalorder %s28, 0
      %p114 = por %p112, %p113
      %p115 = scmp.ne.s32.totalorder %s104, %s107
      %p116 = scmp.eq.s32.totalorder %s33, 3
      %p117 = por %p115, %p116
      %p118 = scmp.ne.s32.totalorder %s107, %s108
      %p119 = scmp.eq.s32.totalorder %s33, 0
      %p120 = por %p118, %p119
      %p121 = scmp.ne.s32.totalorder %s107, %s108
      %p122 = scmp.eq.s32.totalorder %s34, 3
      %p123 = por %p121, %p122
      %p125 = scmp.ne.s32.totalorder %s108, %s124
      %p126 = scmp.eq.s32.totalorder %s34, 0
      %p127 = por %p125, %p126
      %s129 = sadd.s32 %s128, 1
      %p132 = scmp.eq.s32.totalorder %s28, 3
      %p133 = scmp.ne.s32.totalorder %s128, %s130
      %p134 = scmp.eq.s32.totalorder %s28, 0
      %p135 = por %p133, %p134
      %p136 = scmp.ne.s32.totalorder %s128, %s130
      %p137 = scmp.eq.s32.totalorder %s33, 3
      %p138 = por %p136, %p137
      %p139 = scmp.ne.s32.totalorder %s130, %s131
      %p140 = scmp.eq.s32.totalorder %s33, 0
      %p141 = por %p139, %p140
      %p142 = scmp.ne.s32.totalorder %s130, %s131
      %p143 = scmp.eq.s32.totalorder %s34, 3
      %p144 = por %p142, %p143
      %p146 = scmp.ne.s32.totalorder %s131, %s145
      %p147 = scmp.eq.s32.totalorder %s34, 0
      %p148 = por %p146, %p147
      %s150 = sadd.s32 %s149, 1
      %p153 = scmp.eq.s32.totalorder %s28, 3
      %p154 = scmp.ne.s32.totalorder %s149, %s151
      %p155 = scmp.eq.s32.totalorder %s28, 0
      %p156 = por %p154, %p155
      %p157 = scmp.ne.s32.totalorder %s149, %s151
      %p158 = scmp.eq.s32.totalorder %s33, 3
      %p159 = por %p157, %p158
      %p160 = scmp.ne.s32.totalorder %s151, %s152
      %p161 = scmp.eq.s32.totalorder %s33, 0
      %p162 = por %p160, %p161
      %p163 = scmp.ne.s32.totalorder %s151, %s152
      %p164 = scmp.eq.s32.totalorder %s34, 3
      %p165 = por %p163, %p164
      %p167 = scmp.ne.s32.totalorder %s152, %s166
      %p168 = scmp.eq.s32.totalorder %s34, 0
      %p169 = por %p167, %p168
      %s171 = sadd.s32 %s170, 1
      %p174 = scmp.eq.s32.totalorder %s28, 3
      %p175 = scmp.ne.s32.totalorder %s170, %s172
      %p176 = scmp.eq.s32.totalorder %s28, 0
      %p177 = por %p175, %p176
      %p178 = scmp.ne.s32.totalorder %s170, %s172
      %p179 = scmp.eq.s32.totalorder %s33, 3
      %p180 = por %p178, %p179
      %p181 = scmp.ne.s32.totalorder %s172, %s173
      %p182 = scmp.eq.s32.totalorder %s33, 0
      %p183 = por %p181, %p182
      %p184 = scmp.ne.s32.totalorder %s172, %s173
      %p185 = scmp.eq.s32.totalorder %s34, 3
      %p186 = por %p184, %p185
      %p188 = scmp.ne.s32.totalorder %s173, %s187
      %p189 = scmp.eq.s32.totalorder %s34, 0
      %p190 = por %p188, %p189
      %s192 = sadd.s32 %s191, 1
      %p195 = scmp.eq.s32.totalorder %s28, 3
      %p196 = scmp.ne.s32.totalorder %s191, %s193
      %p197 = scmp.eq.s32.totalorder %s28, 0
      %p198 = por %p196, %p197
      %p199 = scmp.ne.s32.totalorder %s191, %s193
      %p200 = scmp.eq.s32.totalorder %s33, 3
      %p201 = por %p199, %p200
      %p202 = scmp.ne.s32.totalorder %s193, %s194
      %p203 = scmp.eq.s32.totalorder %s33, 0
      %p204 = por %p202, %p203
      %p205 = scmp.ne.s32.totalorder %s193, %s194
      %p206 = scmp.eq.s32.totalorder %s34, 3
      %p207 = por %p205, %p206
      %p209 = scmp.ne.s32.totalorder %s194, %s208
      %p210 = scmp.eq.s32.totalorder %s34, 0
      %p211 = por %p209, %p210
      %s213 = sadd.s32 %s212, 1
      %p216 = scmp.eq.s32.totalorder %s28, 3
      %p217 = scmp.ne.s32.totalorder %s212, %s214
      %p218 = scmp.eq.s32.totalorder %s28, 0
      %p219 = por %p217, %p218
      %p220 = scmp.ne.s32.totalorder %s212, %s214
      %p221 = scmp.eq.s32.totalorder %s33, 3
      %p222 = por %p220, %p221
      %p223 = scmp.ne.s32.totalorder %s214, %s215
      %p224 = scmp.eq.s32.totalorder %s33, 0
      %p225 = por %p223, %p224
      %p226 = scmp.ne.s32.totalorder %s214, %s215
      %p227 = scmp.eq.s32.totalorder %s34, 3
      %p228 = por %p226, %p227
      %p230 = scmp.ne.s32.totalorder %s215, %s229
      %p231 = scmp.eq.s32.totalorder %s34, 0
      %p232 = por %p230, %p231
      %s234 = sadd.s32 %s233, 1
      %p237 = scmp.eq.s32.totalorder %s28, 3
      %p238 = scmp.ne.s32.totalorder %s233, %s235
      %p239 = scmp.eq.s32.totalorder %s28, 0
      %p240 = por %p238, %p239
      %p241 = scmp.ne.s32.totalorder %s233, %s235
      %p242 = scmp.eq.s32.totalorder %s33, 3
      %p243 = por %p241, %p242
      %p244 = scmp.ne.s32.totalorder %s235, %s236
      %p245 = scmp.eq.s32.totalorder %s33, 0
      %p246 = por %p244, %p245
      %p247 = scmp.ne.s32.totalorder %s235, %s236
      %p248 = scmp.eq.s32.totalorder %s34, 3
      %p249 = por %p247, %p248
      %p251 = scmp.ne.s32.totalorder %s236, %s250
      %p252 = scmp.eq.s32.totalorder %s34, 0
      %p253 = por %p251, %p252
      %s255 = sadd.s32 %s254, 1
      %p258 = scmp.eq.s32.totalorder %s28, 3
      %p259 = scmp.ne.s32.totalorder %s254, %s256
      %p260 = scmp.eq.s32.totalorder %s28, 0
      %p261 = por %p259, %p260
      %p262 = scmp.ne.s32.totalorder %s254, %s256
      %p263 = scmp.eq.s32.totalorder %s33, 3
      %p264 = por %p262, %p263
      %p265 = scmp.ne.s32.totalorder %s256, %s257
      %p266 = scmp.eq.s32.totalorder %s33, 0
      %p267 = por %p265, %p266
      %p268 = scmp.ne.s32.totalorder %s256, %s257
      %p269 = scmp.eq.s32.totalorder %s34, 3
      %p270 = por %p268, %p269
      %p272 = scmp.ne.s32.totalorder %s257, %s271
      %p273 = scmp.eq.s32.totalorder %s34, 0
      %p274 = por %p272, %p273
      %s276 = sadd.s32 %s275, 1
      %p279 = scmp.eq.s32.totalorder %s28, 3
      %p280 = scmp.ne.s32.totalorder %s275, %s277
      %p281 = scmp.eq.s32.totalorder %s28, 0
      %p282 = por %p280, %p281
      %p283 = scmp.ne.s32.totalorder %s275, %s277
      %p284 = scmp.eq.s32.totalorder %s33, 3
      %p285 = por %p283, %p284
      %p286 = scmp.ne.s32.totalorder %s277, %s278
      %p287 = scmp.eq.s32.totalorder %s33, 0
      %p288 = por %p286, %p287
      %p289 = scmp.ne.s32.totalorder %s277, %s278
      %p290 = scmp.eq.s32.totalorder %s34, 3
      %p291 = por %p289, %p290
      %p293 = scmp.ne.s32.totalorder %s278, %s292
      %p294 = scmp.eq.s32.totalorder %s34, 0
      %p295 = por %p293, %p294
      %s297 = sadd.s32 %s296, 1
      %p300 = scmp.eq.s32.totalorder %s28, 3
      %p301 = scmp.ne.s32.totalorder %s296, %s298
      %p302 = scmp.eq.s32.totalorder %s28, 0
      %p303 = por %p301, %p302
      %p304 = scmp.ne.s32.totalorder %s296, %s298
      %p305 = scmp.eq.s32.totalorder %s33, 3
      %p306 = por %p304, %p305
      %p307 = scmp.ne.s32.totalorder %s298, %s299
      %p308 = scmp.eq.s32.totalorder %s33, 0
      %p309 = por %p307, %p308
      %p310 = scmp.ne.s32.totalorder %s298, %s299
      %p311 = scmp.eq.s32.totalorder %s34, 3
      %p312 = por %p310, %p311
      %p314 = scmp.ne.s32.totalorder %s299, %s313
      %p315 = scmp.eq.s32.totalorder %s34, 0
      %p316 = por %p314, %p315
      %s318 = sadd.s32 %s317, 1
      %p321 = scmp.eq.s32.totalorder %s28, 3
      %p322 = scmp.ne.s32.totalorder %s317, %s319
      %p323 = scmp.eq.s32.totalorder %s28, 0
      %p324 = por %p322, %p323
      %p325 = scmp.ne.s32.totalorder %s317, %s319
      %p326 = scmp.eq.s32.totalorder %s33, 3
      %p327 = por %p325, %p326
      %p328 = scmp.ne.s32.totalorder %s319, %s320
      %p329 = scmp.eq.s32.totalorder %s33, 0
      %p330 = por %p328, %p329
      %p331 = scmp.ne.s32.totalorder %s319, %s320
      %p332 = scmp.eq.s32.totalorder %s34, 3
      %p333 = por %p331, %p332
      %p335 = scmp.ne.s32.totalorder %s320, %s334
      %p336 = scmp.eq.s32.totalorder %s34, 0
      %p337 = por %p335, %p336
      %s339 = sadd.s32 %s338, 1
      %p342 = scmp.eq.s32.totalorder %s28, 3
      %p343 = scmp.ne.s32.totalorder %s338, %s340
      %p344 = scmp.eq.s32.totalorder %s28, 0
      %p345 = por %p343, %p344
      %p346 = scmp.ne.s32.totalorder %s338, %s340
      %p347 = scmp.eq.s32.totalorder %s33, 3
      %p348 = por %p346, %p347
      %p349 = scmp.ne.s32.totalorder %s340, %s341
      %p350 = scmp.eq.s32.totalorder %s33, 0
      %p351 = por %p349, %p350
      %p352 = scmp.ne.s32.totalorder %s340, %s341
      %p353 = scmp.eq.s32.totalorder %s34, 3
      %p354 = por %p352, %p353
      %p356 = scmp.ne.s32.totalorder %s341, %s355
      %p357 = scmp.eq.s32.totalorder %s34, 0
      %p358 = por %p356, %p357
      %s360 = sadd.s32 %s359, 1
      %p363 = scmp.eq.s32.totalorder %s28, 3
      %p364 = scmp.ne.s32.totalorder %s359, %s361
      %p365 = scmp.eq.s32.totalorder %s28, 0
      %p366 = por %p364, %p365
      %p367 = scmp.ne.s32.totalorder %s359, %s361
      %p368 = scmp.eq.s32.totalorder %s33, 3
      %p369 = por %p367, %p368
      %p370 = scmp.ne.s32.totalorder %s361, %s362
      %p371 = scmp.eq.s32.totalorder %s33, 0
      %p372 = por %p370, %p371
      %p373 = scmp.ne.s32.totalorder %s361, %s362
      %p374 = scmp.eq.s32.totalorder %s34, 3
      %p375 = por %p373, %p374
      %p377 = scmp.ne.s32.totalorder %s362, %s376
      %p378 = scmp.eq.s32.totalorder %s34, 0
      %p379 = por %p377, %p378
      %s381 = sadd.s32 %s380, 1
      %p384 = scmp.eq.s32.totalorder %s28, 3
      %p385 = scmp.ne.s32.totalorder %s380, %s382
      %p386 = scmp.eq.s32.totalorder %s28, 0
      %p387 = por %p385, %p386
      %p388 = scmp.ne.s32.totalorder %s380, %s382
      %p389 = scmp.eq.s32.totalorder %s33, 3
      %p390 = por %p388, %p389
      %p391 = scmp.ne.s32.totalorder %s382, %s383
      %p392 = scmp.eq.s32.totalorder %s33, 0
      %p393 = por %p391, %p392
      %p394 = scmp.ne.s32.totalorder %s382, %s383
      %p395 = scmp.eq.s32.totalorder %s34, 3
      %p396 = por %p394, %p395
      %p398 = scmp.ne.s32.totalorder %s383, %s397
      %p399 = scmp.eq.s32.totalorder %s34, 0
      %p400 = por %p398, %p399
      %s402 = sadd.s32 %s401, 1
      %p405 = scmp.eq.s32.totalorder %s28, 3
      %p406 = scmp.ne.s32.totalorder %s401, %s403
      %p407 = scmp.eq.s32.totalorder %s28, 0
      %p408 = por %p406, %p407
      %p409 = scmp.ne.s32.totalorder %s401, %s403
      %p410 = scmp.eq.s32.totalorder %s33, 3
      %p411 = por %p409, %p410
      %p412 = scmp.ne.s32.totalorder %s403, %s404
      %p413 = scmp.eq.s32.totalorder %s33, 0
      %p414 = por %p412, %p413
      %p415 = scmp.ne.s32.totalorder %s403, %s404
      %p416 = scmp.eq.s32.totalorder %s34, 3
      %p417 = por %p415, %p416
      %p419 = scmp.ne.s32.totalorder %s404, %s418
      %p420 = scmp.eq.s32.totalorder %s34, 0
      %p421 = por %p419, %p420
      %s423 = sadd.s32 %s422, 1
      %p426 = scmp.eq.s32.totalorder %s28, 3
      %p427 = scmp.ne.s32.totalorder %s422, %s424
      %p428 = scmp.eq.s32.totalorder %s28, 0
      %p429 = por %p427, %p428
      %p430 = scmp.ne.s32.totalorder %s422, %s424
      %p431 = scmp.eq.s32.totalorder %s33, 3
      %p432 = por %p430, %p431
      %p433 = scmp.ne.s32.totalorder %s424, %s425
      %p434 = scmp.eq.s32.totalorder %s33, 0
      %p435 = por %p433, %p434
      %p436 = scmp.ne.s32.totalorder %s424, %s425
      %p437 = scmp.eq.s32.totalorder %s34, 3
      %p438 = por %p436, %p437
      %p440 = scmp.ne.s32.totalorder %s425, %s439
      %p441 = scmp.eq.s32.totalorder %s34, 0
      %p442 = por %p440, %p441
      %s443 = ssub.s32 %s35, %s47
      %s444 = ssub.s32 %s36, %s43
      %s445 = sor.u32 %s443, %s444
      %p446 = scmp.eq.s32.totalorder %s445, 0
      %s448 = sadd.s32 %s447, 1
      %s449 = scalar_select %p446, %s447, %s448
      %p452 = pneg %p446
      %p453 = scmp.eq.s32.totalorder %s28, 3
      %p454 = por %p452, %p453
      %p455 = scmp.ne.s32.totalorder %s447, %s450
      %p456 = scmp.eq.s32.totalorder %s28, 0
      %p457 = por %p455, %p456
      %p458 = scmp.ne.s32.totalorder %s447, %s450
      %p459 = scmp.eq.s32.totalorder %s33, 3
      %p460 = por %p458, %p459
      %p461 = scmp.ne.s32.totalorder %s450, %s451
      %p462 = scmp.eq.s32.totalorder %s33, 0
      %p463 = por %p461, %p462
      %p464 = scmp.ne.s32.totalorder %s450, %s451
      %p465 = scmp.eq.s32.totalorder %s34, 3
      %p466 = por %p464, %p465
      %p468 = scmp.ne.s32.totalorder %s451, %s467
      %p469 = scmp.eq.s32.totalorder %s34, 0
      %p470 = por %p468, %p469
      %p471 = scmp.le.s32.totalorder 1, %s28
      %p472 = scmp.lt.s32.totalorder %s28, 5
      %p473 = pnand %p471, %p472
      %p474 = pneg %p473
      // Predicated region
      $region9: #{tpu_custom_call.1} parent=5 // pred_check
        _
      $region10: #{tpu_custom_call.1} parent=5 // pred_check_branch
        %476 = sbr.rel (%p473) target = $region12
      $region11: #{tpu_custom_call.1} parent=5 // pred_region
        %s477 = ssub.s32 %s28, 1
        // Predicated region
        $region13: #{tpu_custom_call.1} parent=11 // pred_check
          %p478 = pneg %p141
        $region14: #{tpu_custom_call.1} parent=11 // pred_check_branch
          %480 = sbr.rel (%p478) target = $region16
        $region15: #{tpu_custom_call.1} parent=11 // pred_region
          _
        $region16: #{tpu_custom_call.1} parent=11 // pred_fallthru
          _
        // Predicated region
        $region17: #{tpu_custom_call.1} parent=11 // pred_check
          %p481 = pneg %p162
        $region18: #{tpu_custom_call.1} parent=11 // pred_check_branch
          %483 = sbr.rel (%p481) target = $region20
        $region19: #{tpu_custom_call.1} parent=11 // pred_region
          _
        $region20: #{tpu_custom_call.1} parent=11 // pred_fallthru
          _
        // Predicated region
        $region21: #{tpu_custom_call.1} parent=11 // pred_check
          %p484 = pneg %p183
        $region22: #{tpu_custom_call.1} parent=11 // pred_check_branch
          %486 = sbr.rel (%p484) target = $region24
        $region23: #{tpu_custom_call.1} parent=11 // pred_region
          _
        $region24: #{tpu_custom_call.1} parent=11 // pred_fallthru
          _
        // Predicated region
        $region25: #{tpu_custom_call.1} parent=11 // pred_check
          %p487 = pneg %p204
        $region26: #{tpu_custom_call.1} parent=11 // pred_check_branch
          %489 = sbr.rel (%p487) target = $region28
        $region27: #{tpu_custom_call.1} parent=11 // pred_region
          _
        $region28: #{tpu_custom_call.1} parent=11 // pred_fallthru
          _
        // Predicated region
        $region29: #{tpu_custom_call.1} parent=11 // pred_check
          %p490 = pneg %p225
        $region30: #{tpu_custom_call.1} parent=11 // pred_check_branch
          %492 = sbr.rel (%p490) target = $region32
        $region31: #{tpu_custom_call.1} parent=11 // pred_region
          _
        $region32: #{tpu_custom_call.1} parent=11 // pred_fallthru
          _
        // Predicated region
        $region33: #{tpu_custom_call.1} parent=11 // pred_check
          %p493 = pneg %p246
        $region34: #{tpu_custom_call.1} parent=11 // pred_check_branch
          %495 = sbr.rel (%p493) target = $region36
        $region35: #{tpu_custom_call.1} parent=11 // pred_region
          %s497 = ssub.s32 16, 16
          %498 = vsyncadd [#allocation4], %s497
          %s500 = sshll.u32 [#allocation3], 4
          %s501 = int_to_ptr.vmem [resolvable:$true] %s500
          %503 = dma.hbm_to_vmem [thread:$0]  %s8, 16, %s501, [#allocation4]
        $region36: #{tpu_custom_call.1} parent=11 // pred_fallthru
          _
        // Predicated region
        $region37: #{tpu_custom_call.1} parent=11 // pred_check
          %p504 = pneg %p267
        $region38: #{tpu_custom_call.1} parent=11 // pred_check_branch
          %506 = sbr.rel (%p504) target = $region40
        $region39: #{tpu_custom_call.1} parent=11 // pred_region
          _
        $region40: #{tpu_custom_call.1} parent=11 // pred_fallthru
          _
        // Predicated region
        $region41: #{tpu_custom_call.1} parent=11 // pred_check
          %p507 = pneg %p288
        $region42: #{tpu_custom_call.1} parent=11 // pred_check_branch
          %509 = sbr.rel (%p507) target = $region44
        $region43: #{tpu_custom_call.1} parent=11 // pred_region
          _
        $region44: #{tpu_custom_call.1} parent=11 // pred_fallthru
          _
        // Predicated region
        $region45: #{tpu_custom_call.1} parent=11 // pred_check
          %p510 = pneg %p309
        $region46: #{tpu_custom_call.1} parent=11 // pred_check_branch
          %512 = sbr.rel (%p510) target = $region48
        $region47: #{tpu_custom_call.1} parent=11 // pred_region
          _
        $region48: #{tpu_custom_call.1} parent=11 // pred_fallthru
          _
        // Predicated region
        $region49: #{tpu_custom_call.1} parent=11 // pred_check
          %p513 = pneg %p330
        $region50: #{tpu_custom_call.1} parent=11 // pred_check_branch
          %515 = sbr.rel (%p513) target = $region52
        $region51: #{tpu_custom_call.1} parent=11 // pred_region
          _
        $region52: #{tpu_custom_call.1} parent=11 // pred_fallthru
          _
        // Predicated region
        $region53: #{tpu_custom_call.1} parent=11 // pred_check
          %p516 = pneg %p351
        $region54: #{tpu_custom_call.1} parent=11 // pred_check_branch
          %518 = sbr.rel (%p516) target = $region56
        $region55: #{tpu_custom_call.1} parent=11 // pred_region
          _
        $region56: #{tpu_custom_call.1} parent=11 // pred_fallthru
          _
        // Predicated region
        $region57: #{tpu_custom_call.1} parent=11 // pred_check
          %p519 = pneg %p372
        $region58: #{tpu_custom_call.1} parent=11 // pred_check_branch
          %521 = sbr.rel (%p519) target = $region60
        $region59: #{tpu_custom_call.1} parent=11 // pred_region
          _
        $region60: #{tpu_custom_call.1} parent=11 // pred_fallthru
          _
        // Predicated region
        $region61: #{tpu_custom_call.1} parent=11 // pred_check
          %p522 = pneg %p393
        $region62: #{tpu_custom_call.1} parent=11 // pred_check_branch
          %524 = sbr.rel (%p522) target = $region64
        $region63: #{tpu_custom_call.1} parent=11 // pred_region
          _
        $region64: #{tpu_custom_call.1} parent=11 // pred_fallthru
          _
        // Predicated region
        $region65: #{tpu_custom_call.1} parent=11 // pred_check
          %p525 = pneg %p414
        $region66: #{tpu_custom_call.1} parent=11 // pred_check_branch
          %527 = sbr.rel (%p525) target = $region68
        $region67: #{tpu_custom_call.1} parent=11 // pred_region
          _
        $region68: #{tpu_custom_call.1} parent=11 // pred_fallthru
          _
        // Predicated region
        $region69: #{tpu_custom_call.1} parent=11 // pred_check
          %p528 = pneg %p435
        $region70: #{tpu_custom_call.1} parent=11 // pred_check_branch
          %530 = sbr.rel (%p528) target = $region72
        $region71: #{tpu_custom_call.1} parent=11 // pred_region
          _
        $region72: #{tpu_custom_call.1} parent=11 // pred_fallthru
          _
      $region12: #{tpu_custom_call.1} parent=5 // pred_fallthru
        _
      %p531 = scmp.lt.s32.totalorder %s28, 4
      // Predicated region
      $region73: #{tpu_custom_call.1} parent=5 // pred_check
        %p532 = pneg %p531
      $region74: #{tpu_custom_call.1} parent=5 // pred_check_branch
        %534 = sbr.rel (%p532) target = $region76
      $region75: #{tpu_custom_call.1} parent=5 // pred_region
        // Predicated region
        $region77: #{tpu_custom_call.1} parent=75 // pred_check
          %p535 = pneg %p62
        $region78: #{tpu_custom_call.1} parent=75 // pred_check_branch
          %537 = sbr.rel (%p535) target = $region80
        $region79: #{tpu_custom_call.1} parent=75 // pred_region
          %s538 = sand.u32 %s52, 1
          %s539 = sand.u32 %s52, 1
          %s540 = smul.addr %s539, 16
          %s541 = scalar_lea.vmem [#allocation2], %s540
          %s542 = smul.addr %s35, 8
          %s543 = sadd.s32 %s36, %s542
          %s544 = smul.addr %s543, 4
          %s545 = scalar_lea.vmem %s0, %s544
          // Predicated region
          $region81: #{tpu_custom_call.1} parent=79 // pred_check
            _
          $region82: #{tpu_custom_call.1} parent=79 // pred_check_branch
            %547 = sbr.rel (0) target = $region84
          $region83: #{tpu_custom_call.1} parent=79 // pred_region
            // Predicated region
            $region85: #{tpu_custom_call.1} parent=83 // pred_check
              _
            $region86: #{tpu_custom_call.1} parent=83 // pred_check_branch
              %549 = sbr.rel target = $region88
            $region87: #{tpu_custom_call.1} parent=83 // pred_region
              // Predicated region
              $region100: #{tpu_custom_call.1} parent=87 // pred_check
                _
              $region101: #{tpu_custom_call.1} parent=87 // pred_check_branch
                %571 = sbr.rel (0) target = $region103
              $region102: #{tpu_custom_call.1} parent=87 // pred_region
                loop: start=0, step=1, limit=1
                $region104: #{tpu_custom_call.1} parent=102 // loop_pre_header
                  _
                $region105: #{tpu_custom_call.1} parent=102 // loop_header
                  %s573 = sphi 0, %s577
                  %p574 = scmp.ge.s32.totalorder %s573, 1
                  %s578 = sphi %s545, %s545
                  %s579 = sphi %s541, %s541
                $region106: #{tpu_custom_call.1} parent=102 // loop_header_branch
                  %576 = sbr.rel (%p574) target = $region110
                $region107: #{tpu_custom_call.1} parent=102 // loop_body
                  _
                $region108: #{tpu_custom_call.1} parent=102 // loop_footer
                  %s577 = sadd.s32 1, %s573
                $region109: #{tpu_custom_call.1} parent=102 // loop_footer_branch
                  %572 = sbr.rel target = $region105
                $region110: #{tpu_custom_call.1} parent=102 // loop_exit
                  _
                %s581 = ssub.s32 16, 1
                loop: start=0, step=1, limit=1
                $region111: #{tpu_custom_call.1} parent=102 // loop_pre_header
                  _
                $region112: #{tpu_custom_call.1} parent=102 // loop_header
                  %s583 = sphi 0, %s587
                  %p584 = scmp.ge.s32.totalorder %s583, 1
                  %s588 = sphi %s545, %s545
                  %s589 = sphi %s541, %s541
                $region113: #{tpu_custom_call.1} parent=102 // loop_header_branch
                  %586 = sbr.rel (%p584) target = $region117
                $region114: #{tpu_custom_call.1} parent=102 // loop_body
                  %v590 = vld [vmem:[%s588] sm:%s581]
                  %591 = vst [vmem:[%s589] sm:%s581] %v590
                  %v592 = vld [vmem:[%s588 + $0x8] sm:%s581]
                  %593 = vst [vmem:[%s589 + $0x4] sm:%s581] %v592
                  %v594 = vld [vmem:[%s588 + $0x10] sm:%s581]
                  %595 = vst [vmem:[%s589 + $0x8] sm:%s581] %v594
                  %v596 = vld [vmem:[%s588 + $0x18] sm:%s581]
                  %597 = vst [vmem:[%s589 + $0xc] sm:%s581] %v596
                $region115: #{tpu_custom_call.1} parent=102 // loop_footer
                  %s587 = sadd.s32 1, %s583
                $region116: #{tpu_custom_call.1} parent=102 // loop_footer_branch
                  %582 = sbr.rel target = $region112
                $region117: #{tpu_custom_call.1} parent=102 // loop_exit
                  _
              $region103: #{tpu_custom_call.1} parent=87 // pred_fallthru
                _
            $region88: #{tpu_custom_call.1} parent=83 // pred_fallthru
              _
            // Predicated region
            $region89: #{tpu_custom_call.1} parent=83 // pred_check
              _
            $region90: #{tpu_custom_call.1} parent=83 // pred_check_branch
              %551 = sbr.rel (0) target = $region92
            $region91: #{tpu_custom_call.1} parent=83 // pred_region
              %s553 = ssub.s32 16, 1
              loop: start=0, step=1, limit=1
              $region93: #{tpu_custom_call.1} parent=91 // loop_pre_header
                _
              $region94: #{tpu_custom_call.1} parent=91 // loop_header
                %s555 = sphi 0, %s559
                %p556 = scmp.ge.s32.totalorder %s555, 1
                %s560 = sphi %s545, %s545
                %s561 = sphi %s541, %s541
              $region95: #{tpu_custom_call.1} parent=91 // loop_header_branch
                %558 = sbr.rel (%p556) target = $region99
              $region96: #{tpu_custom_call.1} parent=91 // loop_body
                %v562 = vld [vmem:[%s560] sm:%s553]
                %563 = vst [vmem:[%s561] sm:%s553] %v562
                %v564 = vld [vmem:[%s560 + $0x8] sm:%s553]
                %565 = vst [vmem:[%s561 + $0x4] sm:%s553] %v564
                %v566 = vld [vmem:[%s560 + $0x10] sm:%s553]
                %567 = vst [vmem:[%s561 + $0x8] sm:%s553] %v566
                %v568 = vld [vmem:[%s560 + $0x18] sm:%s553]
                %569 = vst [vmem:[%s561 + $0xc] sm:%s553] %v568
              $region97: #{tpu_custom_call.1} parent=91 // loop_footer
                %s559 = sadd.s32 1, %s555
              $region98: #{tpu_custom_call.1} parent=91 // loop_footer_branch
                %554 = sbr.rel target = $region94
              $region99: #{tpu_custom_call.1} parent=91 // loop_exit
                _
            $region92: #{tpu_custom_call.1} parent=83 // pred_fallthru
              _
          $region84: #{tpu_custom_call.1} parent=79 // pred_fallthru
            _
          %598 = vnop
        $region80: #{tpu_custom_call.1} parent=75 // pred_fallthru
          _
        // Predicated region
        $region118: #{tpu_custom_call.1} parent=75 // pred_check
          %p599 = pneg %p88
        $region119: #{tpu_custom_call.1} parent=75 // pred_check_branch
          %601 = sbr.rel (%p599) target = $region121
        $region120: #{tpu_custom_call.1} parent=75 // pred_region
          %p602 = scmp.lt.s32.totalorder %s35, 1
          %s603 = scalar_select %p602, %s35, 1
          %s604 = smul.addr %s603, 4
          %s605 = scalar_lea.vmem %s1, %s604
        $region121: #{tpu_custom_call.1} parent=75 // pred_fallthru
          _
        // Predicated region
        $region122: #{tpu_custom_call.1} parent=75 // pred_check
          %p606 = pneg %p114
        $region123: #{tpu_custom_call.1} parent=75 // pred_check_branch
          %608 = sbr.rel (%p606) target = $region125
        $region124: #{tpu_custom_call.1} parent=75 // pred_region
          %p609 = scmp.lt.s32.totalorder %s35, 1
          %s610 = scalar_select %p609, %s35, 1
          %s611 = smul.addr %s610, 4
          %s612 = smul.addr %s611, 4
          %s613 = scalar_lea.vmem %s2, %s612
        $region125: #{tpu_custom_call.1} parent=75 // pred_fallthru
          _
      $region76: #{tpu_custom_call.1} parent=5 // pred_fallthru
        _
      %p614 = scmp.le.s32.totalorder 1, %s28
      %p615 = scmp.lt.s32.totalorder %s28, 5
      %p616 = pnand %p614, %p615
      %p617 = pneg %p616
      // Predicated region
      $region126: #{tpu_custom_call.1} parent=5 // pred_check
        _
      $region127: #{tpu_custom_call.1} parent=5 // pred_check_branch
        %619 = sbr.rel (%p616) target = $region129
      $region128: #{tpu_custom_call.1} parent=5 // pred_region
        %s620 = ssub.s32 %s28, 1
        %s621 = sand.u32 %s55, 1
        %s622 = sand.u32 %s55, 1
        %s623 = smul.addr %s622, 16
        %s624 = scalar_lea.vmem [#allocation2], %s623
        // Predicated region
        $region130: #{tpu_custom_call.1} parent=128 // pred_check
          %p625 = pneg %p68
        $region131: #{tpu_custom_call.1} parent=128 // pred_check_branch
          %627 = sbr.rel (%p625) target = $region133
        $region132: #{tpu_custom_call.1} parent=128 // pred_region
          _
        $region133: #{tpu_custom_call.1} parent=128 // pred_fallthru
          _
        // Predicated region
        $region134: #{tpu_custom_call.1} parent=128 // pred_check
          %p628 = pneg %p246
        $region135: #{tpu_custom_call.1} parent=128 // pred_check_branch
          %630 = sbr.rel (%p628) target = $region137
        $region136: #{tpu_custom_call.1} parent=128 // pred_region
          %631 = dma.done [#allocation4], 16
        $region137: #{tpu_custom_call.1} parent=128 // pred_fallthru
          _
        %s632 = sand.u32 %s55, 1
        %s633 = sand.u32 %s55, 1
        %s634 = smul.addr %s633, 16
        %s635 = scalar_lea.vmem [#allocation2], %s634
        %p636 = pneg %p68
        %p637 = pneg %p65
        %p638 = scmp.lt.s32.totalorder %s37, 1
        %s639 = scalar_select %p638, %s37, 1
        %s640 = smul.addr %s639, 4
        %s641 = scalar_lea.vmem %s1, %s640
        %p642 = pneg %p94
        %p643 = pneg %p91
        %p644 = scmp.lt.s32.totalorder %s37, 1
        %s645 = scalar_select %p644, %s37, 1
        %s646 = smul.addr %s645, 4
        %s647 = smul.addr %s646, 4
        %s648 = scalar_lea.vmem %s2, %s647
        %p649 = pneg %p120
        %p650 = pneg %p117
        %p651 = pneg %p141
        %p652 = pneg %p138
        %p653 = pneg %p162
        %p654 = pneg %p159
        %p655 = pneg %p183
        %p656 = pneg %p180
        %p657 = pneg %p204
        %p658 = pneg %p201
        %p659 = pneg %p225
        %p660 = pneg %p222
        %p661 = pneg %p246
        %p662 = pneg %p243
        %p663 = pneg %p267
        %p664 = pneg %p264
        %p665 = pneg %p288
        %p666 = pneg %p285
        %p667 = pneg %p309
        %p668 = pneg %p306
        %p669 = pneg %p330
        %p670 = pneg %p327
        %p671 = pneg %p351
        %p672 = pneg %p348
        %p673 = pneg %p372
        %p674 = pneg %p369
        %p675 = pneg %p393
        %p676 = pneg %p390
        %p677 = pneg %p414
        %p678 = pneg %p411
        %p679 = pneg %p435
        %p680 = pneg %p432
        %p681 = pneg %p463
        %p682 = pneg %p460
        %s683 = sand.u32 %s450, 1
        %s684 = scalar_lea.sflag [#allocation5], %s683
        %s685 = sand.u32 %s450, 1
        %s686 = smul.addr %s685, 16
        %s687 = scalar_lea.vmem [#allocation6], %s686
        %p688 = scmp.lt.s32.totalorder %s37, 1
        %s689 = scalar_select %p688, %s37, 1
        %s690 = smul.addr %s689, 4
        %s691 = scalar_lea.vmem %s1, %s690
        %p692 = scmp.lt.s32.totalorder %s37, 1
        %s693 = scalar_select %p692, %s37, 1
        %s694 = smul.addr %s693, 4
        %s695 = smul.addr %s694, 4
        %s696 = scalar_lea.vmem %s2, %s695
        %v698 = vld [vmem:[%s624] sm:$0xf]
        %v699 = vld [vmem:[%s624 + $0x4] sm:$0xf]
        %v700 = vld [vmem:[%s624 + $0x8] sm:$0xf]
        %v701 = vld [vmem:[%s624 + $0xc] sm:$0xf]
        %v702 = vld [vmem:[%s691] sm:$0xf]
        %v703 = vld [vmem:[%s696] sm:$0xf]
        %v704 = vld [vmem:[%s696 + $0x4] sm:$0xf]
        %v705 = vld [vmem:[%s696 + $0x8] sm:$0xf]
        %v706 = vld [vmem:[%s696 + $0xc] sm:$0xf]
        %v707 = vld [vmem:[%s3] sm:$0xf]
        %v708 = vld [vmem:[%s3 + $0x4] sm:$0xf]
        %v709 = vld [vmem:[%s4] sm:$0xf]
        %v710 = vld [vmem:[%s4 + $0x4] sm:$0xf]
        %v711 = vunpack.c.l.bf16 %v709
        %v712 = vunpack.c.l.bf16 %v710
        %714 = vset.pattern.permute.xlu0 0
        %715 = vperm.xlu0 %714, %v711
        %v716 = vpop.permute.xlu0 %715
        %719 = vset.pattern.permute.xlu0 0
        %720 = vperm.xlu0 %719, %v712
        %v721 = vpop.permute.xlu0 %720
        %v725 = vunpack.c.l.b16 %v707
        %v726 = vunpack.c.l.b16 %v708
        %v727 = vpack.c.b16 %v726, %v725
        %v732 = vunpack.c.l.b16 %v698
        %v733 = vunpack.c.l.b16 %v699
        %v734 = vunpack.c.l.b16 %v700
        %v735 = vunpack.c.l.b16 %v701
        %v736 = vpack.c.b16 %v733, %v732
        %v737 = vpack.c.b16 %v735, %v734
        %vm740 = vcmask 261120
        %v742 = vsel %vm740, %v727, 0
        %744 = vmatprep.subr.bf16.mxu0 0
        %745 = vmatpush1.bf16.msra.mxu0 0
        %746 = vmatprep.subr.bf16.mxu0 0
        %747 = vmatpush1.bf16.msra.mxu0 0
        %748 = vmatprep.subr.bf16.mxu0 0
        %749 = vmatpush1.bf16.msra.mxu0 0
        %750 = vmatprep.subr.bf16.mxu0 0
        %751 = vmatpush1.bf16.msra.mxu0 0
        %752 = vmatprep.subr.bf16.mxu0 0
        %753 = vmatpush1.bf16.msra.mxu0 0
        %754 = vmatprep.subr.bf16.mxu0 0
        %755 = vmatpush1.bf16.msra.mxu0 0
        %756 = vmatprep.subr.bf16.mxu0 0
        %757 = vmatpush1.bf16.msra.mxu0 %v737
        %758 = vmatprep.subr.bf16.mxu0 0
        %759 = vmatpush1.bf16.msra.mxu0 %v736
        %760 = vmatprep.subr.bf16.mxu0 0
        %761 = vmatpush2.bf16.msra.mxu0 0
        %762 = vmatprep.subr.bf16.mxu0 0
        %763 = vmatpush2.bf16.msra.mxu0 0
        %764 = vmatprep.subr.bf16.mxu0 0
        %765 = vmatpush2.bf16.msra.mxu0 0
        %766 = vmatprep.subr.bf16.mxu0 0
        %767 = vmatpush2.bf16.msra.mxu0 0
        %768 = vmatprep.subr.bf16.mxu0 0
        %769 = vmatpush2.bf16.msra.mxu0 0
        %770 = vmatprep.subr.bf16.mxu0 0
        %771 = vmatpush2.bf16.msra.mxu0 0
        %772 = vmatprep.subr.bf16.mxu0 0
        %773 = vmatpush2.bf16.msra.mxu0 0
        %774 = vmatprep.subr.bf16.mxu0 0
        %775 = vmatpush2.bf16.msra.mxu0 0
        %776 = vmatprep.mubr.bf16.mxu0 0
        %777 = vmatmul.mubr.bf16.gmra.mxu0 %v742
        %v778 = vpop.f32.mrf.mxu0
        %v779 = vadd.f32 %v716, %v778
        %v780 = vpop.f32.mrf.mxu0
        %v781 = vpop.f32.mrf.mxu0
        %v782 = vadd.f32 %v721, %v781
        %v783 = vpop.f32.mrf.mxu0
        %784 = vdwg.mxu0
        %v785 = vmax.f32 %v779, 0.0
        %v786 = vmax.f32 %v782, 0.0
        %v787 = vpack.c.bf16 %v786, %v785
        %v788 = vld [vmem:[%s5] sm:$0xf]
        %v789 = vld [vmem:[%s5 + $0x4] sm:$0xf]
        %v790 = vld [vmem:[%s6] sm:$0xf]
        %v791 = vld [vmem:[%s6 + $0x4] sm:$0xf]
        %v792 = vunpack.c.l.bf16 %v790
        %v793 = vunpack.c.l.bf16 %v791
        %795 = vset.pattern.permute.xlu0 0
        %796 = vperm.xlu0 %795, %v792
        %v797 = vpop.permute.xlu0 %796
        %800 = vset.pattern.permute.xlu0 0
        %801 = vperm.xlu0 %800, %v793
        %v802 = vpop.permute.xlu0 %801
        %v806 = vunpack.c.l.b16 %v788
        %v807 = vunpack.c.l.b16 %v789
        %v808 = vpack.c.b16 %v807, %v806
        %vm809 = vcmask 130048
        %v811 = vsel %vm809, %v808, 0
        %813 = vmatprep.subr.bf16.mxu0 0
        %814 = vmatpush1.bf16.msra.mxu0 0
        %815 = vmatprep.subr.bf16.mxu0 0
        %816 = vmatpush1.bf16.msra.mxu0 0
        %817 = vmatprep.subr.bf16.mxu0 0
        %818 = vmatpush1.bf16.msra.mxu0 0
        %819 = vmatprep.subr.bf16.mxu0 0
        %820 = vmatpush1.bf16.msra.mxu0 0
        %821 = vmatprep.subr.bf16.mxu0 0
        %822 = vmatpush1.bf16.msra.mxu0 0
        %823 = vmatprep.subr.bf16.mxu0 0
        %824 = vmatpush1.bf16.msra.mxu0 0
        %825 = vmatprep.subr.bf16.mxu0 0
        %826 = vmatpush1.bf16.msra.mxu0 0
        %827 = vmatprep.subr.bf16.mxu0 0
        %828 = vmatpush1.bf16.msra.mxu0 %v787
        %829 = vmatprep.subr.bf16.mxu0 0
        %830 = vmatpush2.bf16.msra.mxu0 0
        %831 = vmatprep.subr.bf16.mxu0 0
        %832 = vmatpush2.bf16.msra.mxu0 0
        %833 = vmatprep.subr.bf16.mxu0 0
        %834 = vmatpush2.bf16.msra.mxu0 0
        %835 = vmatprep.subr.bf16.mxu0 0
        %836 = vmatpush2.bf16.msra.mxu0 0
        %837 = vmatprep.subr.bf16.mxu0 0
        %838 = vmatpush2.bf16.msra.mxu0 0
        %839 = vmatprep.subr.bf16.mxu0 0
        %840 = vmatpush2.bf16.msra.mxu0 0
        %841 = vmatprep.subr.bf16.mxu0 0
        %842 = vmatpush2.bf16.msra.mxu0 0
        %843 = vmatprep.subr.bf16.mxu0 0
        %844 = vmatpush2.bf16.msra.mxu0 0
        %845 = vmatprep.mubr.bf16.mxu0 0
        %846 = vmatmul.mubr.bf16.gmra.mxu0 %v811
        %v847 = vpop.f32.mrf.mxu0
        %v848 = vadd.f32 %v797, %v847
        %v849 = vpop.f32.mrf.mxu0
        %v850 = vpop.f32.mrf.mxu0
        %v851 = vadd.f32 %v802, %v850
        %v852 = vpop.f32.mrf.mxu0
        %853 = vdwg.mxu0
        %v854 = vmax.f32 %v848, 0.0
        %v855 = vmax.f32 %v851, 0.0
        %v856 = vpack.c.bf16 %v855, %v854
        %v857 = vld [vmem:[%s7] sm:$0xf]
        %v858 = vld [vmem:[%s7 + $0x4] sm:$0xf]
        %v859 = vld [vmem:[%s7 + $0x8] sm:$0xf]
        %v860 = vld [vmem:[%s7 + $0xc] sm:$0xf]
        %v861 = vld [vmem:[#allocation3] sm:$0x1]
        %v862 = vunpack.c.l.bf16 %v861
        %v863 = vlaneseq
        %v864 = vshrl.u32 %v863, 7
        %v865 = vsub.s32 0, %v864
        %v866 = vrot.slane %v862, %v865
        %v871 = vunpack.c.l.b16 %v857
        %v872 = vunpack.c.l.b16 %v858
        %v873 = vunpack.c.l.b16 %v859
        %v874 = vunpack.c.l.b16 %v860
        %v875 = vpack.c.b16 %v872, %v871
        %v876 = vpack.c.b16 %v874, %v873
        %v880 = vsel %vm740, %v702, 0
        %882 = vmatprep.subr.bf16.mxu0 0
        %883 = vmatpush1.bf16.msra.mxu0 0
        %884 = vmatprep.subr.bf16.mxu0 0
        %885 = vmatpush1.bf16.msra.mxu0 0
        %886 = vmatprep.subr.bf16.mxu0 0
        %887 = vmatpush1.bf16.msra.mxu0 0
        %888 = vmatprep.subr.bf16.mxu0 0
        %889 = vmatpush1.bf16.msra.mxu0 0
        %890 = vmatprep.subr.bf16.mxu0 0
        %891 = vmatpush1.bf16.msra.mxu0 0
        %892 = vmatprep.subr.bf16.mxu0 0
        %893 = vmatpush1.bf16.msra.mxu0 0
        %894 = vmatprep.subr.bf16.mxu0 0
        %895 = vmatpush1.bf16.msra.mxu0 %v876
        %896 = vmatprep.subr.bf16.mxu0 0
        %897 = vmatpush1.bf16.msra.mxu0 %v875
        %898 = vmatprep.subr.bf16.mxu0 0
        %899 = vmatpush2.bf16.msra.mxu0 0
        %900 = vmatprep.subr.bf16.mxu0 0
        %901 = vmatpush2.bf16.msra.mxu0 0
        %902 = vmatprep.subr.bf16.mxu0 0
        %903 = vmatpush2.bf16.msra.mxu0 0
        %904 = vmatprep.subr.bf16.mxu0 0
        %905 = vmatpush2.bf16.msra.mxu0 0
        %906 = vmatprep.subr.bf16.mxu0 0
        %907 = vmatpush2.bf16.msra.mxu0 0
        %908 = vmatprep.subr.bf16.mxu0 0
        %909 = vmatpush2.bf16.msra.mxu0 0
        %910 = vmatprep.subr.bf16.mxu0 0
        %911 = vmatpush2.bf16.msra.mxu0 0
        %912 = vmatprep.subr.bf16.mxu0 0
        %913 = vmatpush2.bf16.msra.mxu0 0
        %914 = vmatprep.mubr.bf16.mxu0 0
        %915 = vmatmul.mubr.bf16.gmra.mxu0 %v880
        %v916 = vpop.f32.mrf.mxu0
        %v917 = vadd.f32 %v866, %v916
        %v918 = vpop.f32.mrf.mxu0
        %v919 = vpop.f32.mrf.mxu0
        %v920 = vpop.f32.mrf.mxu0
        %921 = vdwg.mxu0
        %v922 = vmax.f32 %v917, 0.0
        %v923 = vpack.c.bf16 %v922, %v922
        %v924 = vld [vmem:[%s9] sm:$0xf]
        %v925 = vld [vmem:[%s9 + $0x4] sm:$0xf]
        %v926 = vld [vmem:[%s10] sm:$0x1]
        %v927 = vunpack.c.l.bf16 %v926
        %v928 = vlaneseq
        %v929 = vshrl.u32 %v928, 7
        %v930 = vsub.s32 0, %v929
        %v931 = vrot.slane %v927, %v930
        %v934 = vunpack.c.l.b16 %v924
        %v935 = vunpack.c.l.b16 %v925
        %v936 = vpack.c.b16 %v935, %v934
        %v939 = vsel %vm809, %v923, 0
        %941 = vmatprep.subr.bf16.mxu0 0
        %942 = vmatpush1.bf16.msra.mxu0 0
        %943 = vmatprep.subr.bf16.mxu0 0
        %944 = vmatpush1.bf16.msra.mxu0 0
        %945 = vmatprep.subr.bf16.mxu0 0
        %946 = vmatpush1.bf16.msra.mxu0 0
        %947 = vmatprep.subr.bf16.mxu0 0
        %948 = vmatpush1.bf16.msra.mxu0 0
        %949 = vmatprep.subr.bf16.mxu0 0
        %950 = vmatpush1.bf16.msra.mxu0 0
        %951 = vmatprep.subr.bf16.mxu0 0
        %952 = vmatpush1.bf16.msra.mxu0 0
        %953 = vmatprep.subr.bf16.mxu0 0
        %954 = vmatpush1.bf16.msra.mxu0 0
        %955 = vmatprep.subr.bf16.mxu0 0
        %956 = vmatpush1.bf16.msra.mxu0 %v936
        %957 = vmatprep.subr.bf16.mxu0 0
        %958 = vmatpush2.bf16.msra.mxu0 0
        %959 = vmatprep.subr.bf16.mxu0 0
        %960 = vmatpush2.bf16.msra.mxu0 0
        %961 = vmatprep.subr.bf16.mxu0 0
        %962 = vmatpush2.bf16.msra.mxu0 0
        %963 = vmatprep.subr.bf16.mxu0 0
        %964 = vmatpush2.bf16.msra.mxu0 0
        %965 = vmatprep.subr.bf16.mxu0 0
        %966 = vmatpush2.bf16.msra.mxu0 0
        %967 = vmatprep.subr.bf16.mxu0 0
        %968 = vmatpush2.bf16.msra.mxu0 0
        %969 = vmatprep.subr.bf16.mxu0 0
        %970 = vmatpush2.bf16.msra.mxu0 0
        %971 = vmatprep.subr.bf16.mxu0 0
        %972 = vmatpush2.bf16.msra.mxu0 0
        %973 = vmatprep.mubr.bf16.mxu0 0
        %974 = vmatmul.mubr.bf16.gmra.mxu0 %v939
        %v975 = vpop.f32.mrf.mxu0
        %v976 = vadd.f32 %v931, %v975
        %v977 = vpop.f32.mrf.mxu0
        %v978 = vpop.f32.mrf.mxu0
        %v979 = vpop.f32.mrf.mxu0
        %980 = vdwg.mxu0
        %v981 = vmax.f32 %v976, 0.0
        %v982 = vpack.c.bf16 %v981, %v981
        %v983 = vld [vmem:[%s11] sm:$0xf]
        %v984 = vld [vmem:[%s11 + $0x4] sm:$0xf]
        %v985 = vld [vmem:[%s12] sm:$0xf]
        %v986 = vld [vmem:[%s12 + $0x4] sm:$0xf]
        %v987 = vunpack.c.l.bf16 %v985
        %v988 = vunpack.c.l.bf16 %v986
        %990 = vset.pattern.permute.xlu0 0
        %991 = vperm.xlu0 %990, %v987
        %v992 = vpop.permute.xlu0 %991
        %995 = vset.pattern.permute.xlu0 0
        %996 = vperm.xlu0 %995, %v988
        %v997 = vpop.permute.xlu0 %996
        %v1001 = vunpack.c.l.b16 %v983
        %v1002 = vunpack.c.l.b16 %v984
        %v1003 = vpack.c.b16 %v1002, %v1001
        %v1008 = vunpack.c.l.b16 %v703
        %v1009 = vunpack.c.l.b16 %v704
        %v1010 = vunpack.c.l.b16 %v705
        %v1011 = vunpack.c.l.b16 %v706
        %v1012 = vpack.c.b16 %v1009, %v1008
        %v1013 = vpack.c.b16 %v1011, %v1010
        %v1017 = vsel %vm740, %v1003, 0
        %1019 = vmatprep.subr.bf16.mxu0 0
        %1020 = vmatpush1.bf16.msra.mxu0 0
        %1021 = vmatprep.subr.bf16.mxu0 0
        %1022 = vmatpush1.bf16.msra.mxu0 0
        %1023 = vmatprep.subr.bf16.mxu0 0
        %1024 = vmatpush1.bf16.msra.mxu0 0
        %1025 = vmatprep.subr.bf16.mxu0 0
        %1026 = vmatpush1.bf16.msra.mxu0 0
        %1027 = vmatprep.subr.bf16.mxu0 0
        %1028 = vmatpush1.bf16.msra.mxu0 0
        %1029 = vmatprep.subr.bf16.mxu0 0
        %1030 = vmatpush1.bf16.msra.mxu0 0
        %1031 = vmatprep.subr.bf16.mxu0 0
        %1032 = vmatpush1.bf16.msra.mxu0 %v1013
        %1033 = vmatprep.subr.bf16.mxu0 0
        %1034 = vmatpush1.bf16.msra.mxu0 %v1012
        %1035 = vmatprep.subr.bf16.mxu0 0
        %1036 = vmatpush2.bf16.msra.mxu0 0
        %1037 = vmatprep.subr.bf16.mxu0 0
        %1038 = vmatpush2.bf16.msra.mxu0 0
        %1039 = vmatprep.subr.bf16.mxu0 0
        %1040 = vmatpush2.bf16.msra.mxu0 0
        %1041 = vmatprep.subr.bf16.mxu0 0
        %1042 = vmatpush2.bf16.msra.mxu0 0
        %1043 = vmatprep.subr.bf16.mxu0 0
        %1044 = vmatpush2.bf16.msra.mxu0 0
        %1045 = vmatprep.subr.bf16.mxu0 0
        %1046 = vmatpush2.bf16.msra.mxu0 0
        %1047 = vmatprep.subr.bf16.mxu0 0
        %1048 = vmatpush2.bf16.msra.mxu0 0
        %1049 = vmatprep.subr.bf16.mxu0 0
        %1050 = vmatpush2.bf16.msra.mxu0 0
        %1051 = vmatprep.mubr.bf16.mxu0 0
        %1052 = vmatmul.mubr.bf16.gmra.mxu0 %v1017
        %v1053 = vpop.f32.mrf.mxu0
        %v1054 = vadd.f32 %v992, %v1053
        %v1055 = vpop.f32.mrf.mxu0
        %v1056 = vpop.f32.mrf.mxu0
        %v1057 = vadd.f32 %v997, %v1056
        %v1058 = vpop.f32.mrf.mxu0
        %1059 = vdwg.mxu0
        %v1060 = vmax.f32 %v1054, 0.0
        %v1061 = vmax.f32 %v1057, 0.0
        %v1062 = vpack.c.bf16 %v1061, %v1060
        %v1064 = vsel %vm809, %v982, 0
        %1066 = vmatprep.subr.bf16.mxu0 0
        %1067 = vmatpush1.bf16.msra.mxu0 0
        %1068 = vmatprep.subr.bf16.mxu0 0
        %1069 = vmatpush1.bf16.msra.mxu0 0
        %1070 = vmatprep.subr.bf16.mxu0 0
        %1071 = vmatpush1.bf16.msra.mxu0 0
        %1072 = vmatprep.subr.bf16.mxu0 0
        %1073 = vmatpush1.bf16.msra.mxu0 0
        %1074 = vmatprep.subr.bf16.mxu0 0
        %1075 = vmatpush1.bf16.msra.mxu0 0
        %1076 = vmatprep.subr.bf16.mxu0 0
        %1077 = vmatpush1.bf16.msra.mxu0 0
        %1078 = vmatprep.subr.bf16.mxu0 0
        %1079 = vmatpush1.bf16.msra.mxu0 0
        %1080 = vmatprep.subr.bf16.mxu0 0
        %1081 = vmatpush1.bf16.msra.mxu0 %v856
        %1082 = vmatprep.subr.bf16.mxu0 0
        %1083 = vmatpush2.bf16.msra.mxu0 0
        %1084 = vmatprep.subr.bf16.mxu0 0
        %1085 = vmatpush2.bf16.msra.mxu0 0
        %1086 = vmatprep.subr.bf16.mxu0 0
        %1087 = vmatpush2.bf16.msra.mxu0 0
        %1088 = vmatprep.subr.bf16.mxu0 0
        %1089 = vmatpush2.bf16.msra.mxu0 0
        %1090 = vmatprep.subr.bf16.mxu0 0
        %1091 = vmatpush2.bf16.msra.mxu0 0
        %1092 = vmatprep.subr.bf16.mxu0 0
        %1093 = vmatpush2.bf16.msra.mxu0 0
        %1094 = vmatprep.subr.bf16.mxu0 0
        %1095 = vmatpush2.bf16.msra.mxu0 0
        %1096 = vmatprep.subr.bf16.mxu0 0
        %1097 = vmatpush2.bf16.msra.mxu0 0
        %1098 = vmatprep.mubr.bf16.mxu0 0
        %1099 = vmatmul.mubr.bf16.gmra.mxu0 %v1064
        %v1100 = vpop.f32.mrf.mxu0
        %v1101 = vadd.f32 0.0, %v1100
        %v1102 = vpop.f32.mrf.mxu0
        %v1103 = vpop.f32.mrf.mxu0
        %v1104 = vpop.f32.mrf.mxu0
        %1105 = vdwg.mxu0
        %v1106 = vrot.slane %v1101, 4
        %v1107 = vmax.f32 %v1101, %v1106
        %v1108 = vrot.slane %v1107, 2
        %v1109 = vmax.f32 %v1107, %v1108
        %v1110 = vrot.slane %v1109, 1
        %v1111 = vmax.f32 %v1109, %v1110
        %v1112 = vsub.f32 %v1101, %v1111
        %v1113 = vmul.f32 %v1112, 1.442695
        %v1114 = vpow.pop %v1113
        %v1115 = vrot.slane %v1114, 4
        %v1116 = vadd.f32 %v1114, %v1115
        %v1117 = vrot.slane %v1116, 2
        %v1118 = vadd.f32 %v1116, %v1117
        %v1119 = vrot.slane %v1118, 1
        %v1120 = vadd.f32 %v1118, %v1119
        %v1121 = vrcp.pop %v1120
        %v1122 = vmul.f32 %v1114, %v1121
        %v1123 = vpack.c.bf16 %v1122, %v1122
        %vm1124 = vcmask 64512
        %v1126 = vsel %vm1124, %v1062, 0
        %vm1128 = vcmask 1043456
        %v1130 = vsel %vm1128, %v1123, 0
        %1132 = vmatprep.subr.bf16.mxu0 0
        %1133 = vmatpush1.bf16.msra.mxu0 0
        %1134 = vmatprep.subr.bf16.mxu0 0
        %1135 = vmatpush1.bf16.msra.mxu0 0
        %1136 = vmatprep.subr.bf16.mxu0 0
        %1137 = vmatpush1.bf16.msra.mxu0 0
        %1138 = vmatprep.subr.bf16.mxu0 0
        %1139 = vmatpush1.bf16.msra.mxu0 0
        %1140 = vmatprep.subr.bf16.mxu0 0
        %1141 = vmatpush1.bf16.msra.mxu0 0
        %1142 = vmatprep.subr.bf16.mxu0 0
        %1143 = vmatpush1.bf16.msra.mxu0 0
        %1144 = vmatprep.subr.bf16.mxu0 0
        %1145 = vmatpush1.bf16.msra.mxu0 0
        %1146 = vmatprep.subr.bf16.mxu0 0
        %1147 = vmatpush1.bf16.msra.mxu0 %v1130
        %1148 = vmatprep.subr.bf16.mxu0 0
        %1149 = vmatpush2.bf16.msra.mxu0 0
        %1150 = vmatprep.subr.bf16.mxu0 0
        %1151 = vmatpush2.bf16.msra.mxu0 0
        %1152 = vmatprep.subr.bf16.mxu0 0
        %1153 = vmatpush2.bf16.msra.mxu0 0
        %1154 = vmatprep.subr.bf16.mxu0 0
        %1155 = vmatpush2.bf16.msra.mxu0 0
        %1156 = vmatprep.subr.bf16.mxu0 0
        %1157 = vmatpush2.bf16.msra.mxu0 0
        %1158 = vmatprep.subr.bf16.mxu0 0
        %1159 = vmatpush2.bf16.msra.mxu0 0
        %1160 = vmatprep.subr.bf16.mxu0 0
        %1161 = vmatpush2.bf16.msra.mxu0 0
        %1162 = vmatprep.subr.bf16.mxu0 0
        %1163 = vmatpush2.bf16.msra.mxu0 0
        %1164 = vmatprep.mubr.bf16.mxu0 0
        %1165 = vmatmul.mubr.bf16.gmra.mxu0 %v1126
        %v1166 = vpop.f32.mrf.mxu0
        %v1167 = vadd.f32 0.0, %v1166
        %v1168 = vpop.f32.mrf.mxu0
        %v1169 = vpop.f32.mrf.mxu0
        %v1170 = vadd.f32 0.0, %v1169
        %v1171 = vpop.f32.mrf.mxu0
        %1172 = vdwg.mxu0
        %v1173 = vpack.c.bf16 %v1170, %v1167
        %v1174 = vld [vmem:[%s13] sm:$0xf]
        %v1175 = vld [vmem:[%s13 + $0x4] sm:$0xf]
        %v1176 = vld [vmem:[%s13 + $0x8] sm:$0xf]
        %v1177 = vld [vmem:[%s13 + $0xc] sm:$0xf]
        %v1178 = vld [vmem:[%s14] sm:$0xf]
        %v1179 = vld [vmem:[%s14 + $0x4] sm:$0xf]
        %v1180 = vld [vmem:[%s14 + $0x8] sm:$0xf]
        %v1181 = vld [vmem:[%s14 + $0xc] sm:$0xf]
        %v1182 = vunpack.c.l.bf16 %v1178
        %v1183 = vunpack.c.l.bf16 %v1179
        %v1184 = vunpack.c.l.bf16 %v1180
        %v1185 = vunpack.c.l.bf16 %v1181
        %1187 = vset.pattern.permute.xlu0 0
        %1188 = vperm.xlu0 %1187, %v1182
        %v1189 = vpop.permute.xlu0 %1188
        %1192 = vset.pattern.permute.xlu0 0
        %1193 = vperm.xlu0 %1192, %v1183
        %v1194 = vpop.permute.xlu0 %1193
        %1197 = vset.pattern.permute.xlu0 0
        %1198 = vperm.xlu0 %1197, %v1184
        %v1199 = vpop.permute.xlu0 %1198
        %1202 = vset.pattern.permute.xlu0 0
        %1203 = vperm.xlu0 %1202, %v1185
        %v1204 = vpop.permute.xlu0 %1203
        %v1210 = vunpack.c.l.b16 %v1174
        %v1211 = vunpack.c.l.b16 %v1175
        %v1212 = vunpack.c.l.b16 %v1176
        %v1213 = vunpack.c.l.b16 %v1177
        %v1214 = vpack.c.b16 %v1211, %v1210
        %v1215 = vpack.c.b16 %v1213, %v1212
        %v1217 = vsel %vm809, %v1214, 0
        %v1220 = vsel %vm809, %v1215, 0
        %1222 = vmatprep.subr.bf16.mxu0 0
        %1223 = vmatpush1.bf16.msra.mxu0 0
        %1224 = vmatprep.subr.bf16.mxu0 0
        %1225 = vmatpush1.bf16.msra.mxu0 0
        %1226 = vmatprep.subr.bf16.mxu0 0
        %1227 = vmatpush1.bf16.msra.mxu0 0
        %1228 = vmatprep.subr.bf16.mxu0 0
        %1229 = vmatpush1.bf16.msra.mxu0 0
        %1230 = vmatprep.subr.bf16.mxu0 0
        %1231 = vmatpush1.bf16.msra.mxu0 0
        %1232 = vmatprep.subr.bf16.mxu0 0
        %1233 = vmatpush1.bf16.msra.mxu0 0
        %1234 = vmatprep.subr.bf16.mxu0 0
        %1235 = vmatpush1.bf16.msra.mxu0 0
        %1236 = vmatprep.subr.bf16.mxu0 0
        %1237 = vmatpush1.bf16.msra.mxu0 %v1173
        %1238 = vmatprep.subr.bf16.mxu0 0
        %1239 = vmatpush2.bf16.msra.mxu0 0
        %1240 = vmatprep.subr.bf16.mxu0 0
        %1241 = vmatpush2.bf16.msra.mxu0 0
        %1242 = vmatprep.subr.bf16.mxu0 0
        %1243 = vmatpush2.bf16.msra.mxu0 0
        %1244 = vmatprep.subr.bf16.mxu0 0
        %1245 = vmatpush2.bf16.msra.mxu0 0
        %1246 = vmatprep.subr.bf16.mxu0 0
        %1247 = vmatpush2.bf16.msra.mxu0 0
        %1248 = vmatprep.subr.bf16.mxu0 0
        %1249 = vmatpush2.bf16.msra.mxu0 0
        %1250 = vmatprep.subr.bf16.mxu0 0
        %1251 = vmatpush2.bf16.msra.mxu0 0
        %1252 = vmatprep.subr.bf16.mxu0 0
        %1253 = vmatpush2.bf16.msra.mxu0 0
        %1254 = vmatprep.mubr.bf16.mxu0 0
        %1255 = vmatmul.mubr.bf16.gmra.mxu0 %v1217
        %v1256 = vpop.f32.mrf.mxu0
        %v1257 = vadd.f32 %v1189, %v1256
        %v1258 = vpop.f32.mrf.mxu0
        %v1259 = vpop.f32.mrf.mxu0
        %v1260 = vadd.f32 %v1194, %v1259
        %v1261 = vpop.f32.mrf.mxu0
        %1262 = vmatprep.mubr.bf16.mxu0 0
        %1263 = vmatmul.mubr.bf16.gmra.mxu0 %v1220
        %v1264 = vpop.f32.mrf.mxu0
        %v1265 = vadd.f32 %v1199, %v1264
        %v1266 = vpop.f32.mrf.mxu0
        %v1267 = vpop.f32.mrf.mxu0
        %v1268 = vadd.f32 %v1204, %v1267
        %v1269 = vpop.f32.mrf.mxu0
        %1270 = vdwg.mxu0
        %v1271 = vmax.f32 %v1257, 0.0
        %v1272 = vmax.f32 %v1260, 0.0
        %v1273 = vmax.f32 %v1265, 0.0
        %v1274 = vmax.f32 %v1268, 0.0
        %v1275 = vpack.c.bf16 %v1272, %v1271
        %v1276 = vpack.c.bf16 %v1274, %v1273
        %v1277 = vld [vmem:[%s15] sm:$0xf]
        %v1278 = vld [vmem:[%s15 + $0x4] sm:$0xf]
        %v1279 = vld [vmem:[%s15 + $0x8] sm:$0xf]
        %v1280 = vld [vmem:[%s15 + $0xc] sm:$0xf]
        %v1281 = vld [vmem:[%s16] sm:$0xf]
        %v1282 = vld [vmem:[%s16 + $0x4] sm:$0xf]
        %v1283 = vld [vmem:[%s16 + $0x8] sm:$0xf]
        %v1284 = vld [vmem:[%s16 + $0xc] sm:$0xf]
        %v1289 = vunpack.c.l.b16 %v1281
        %v1290 = vunpack.c.l.b16 %v1282
        %v1291 = vunpack.c.l.b16 %v1283
        %v1292 = vunpack.c.l.b16 %v1284
        %v1293 = vpack.c.b16 %v1290, %v1289
        %v1294 = vpack.c.b16 %v1292, %v1291
        %v1296 = vsel %vm740, %v1293, 0
        %v1299 = vsel %vm740, %v1294, 0
        %1301 = vmatprep.subr.bf16.mxu0 0
        %1302 = vmatpush1.bf16.msra.mxu0 0
        %1303 = vmatprep.subr.bf16.mxu0 0
        %1304 = vmatpush1.bf16.msra.mxu0 0
        %1305 = vmatprep.subr.bf16.mxu0 0
        %1306 = vmatpush1.bf16.msra.mxu0 0
        %1307 = vmatprep.subr.bf16.mxu0 0
        %1308 = vmatpush1.bf16.msra.mxu0 0
        %1309 = vmatprep.subr.bf16.mxu0 0
        %1310 = vmatpush1.bf16.msra.mxu0 0
        %1311 = vmatprep.subr.bf16.mxu0 0
        %1312 = vmatpush1.bf16.msra.mxu0 0
        %1313 = vmatprep.subr.bf16.mxu0 0
        %1314 = vmatpush1.bf16.msra.mxu0 %v737
        %1315 = vmatprep.subr.bf16.mxu0 0
        %1316 = vmatpush1.bf16.msra.mxu0 %v736
        %1317 = vmatprep.subr.bf16.mxu0 0
        %1318 = vmatpush2.bf16.msra.mxu0 0
        %1319 = vmatprep.subr.bf16.mxu0 0
        %1320 = vmatpush2.bf16.msra.mxu0 0
        %1321 = vmatprep.subr.bf16.mxu0 0
        %1322 = vmatpush2.bf16.msra.mxu0 0
        %1323 = vmatprep.subr.bf16.mxu0 0
        %1324 = vmatpush2.bf16.msra.mxu0 0
        %1325 = vmatprep.subr.bf16.mxu0 0
        %1326 = vmatpush2.bf16.msra.mxu0 0
        %1327 = vmatprep.subr.bf16.mxu0 0
        %1328 = vmatpush2.bf16.msra.mxu0 0
        %1329 = vmatprep.subr.bf16.mxu0 0
        %1330 = vmatpush2.bf16.msra.mxu0 0
        %1331 = vmatprep.subr.bf16.mxu0 0
        %1332 = vmatpush2.bf16.msra.mxu0 0
        %1333 = vmatprep.mubr.bf16.mxu0 0
        %1334 = vmatmul.mubr.bf16.gmra.mxu0 %v1296
        %v1335 = vpop.f32.mrf.mxu0
        %v1336 = vadd.f32 0.0, %v1335
        %v1337 = vpop.f32.mrf.mxu0
        %v1338 = vpop.f32.mrf.mxu0
        %v1339 = vadd.f32 0.0, %v1338
        %v1340 = vpop.f32.mrf.mxu0
        %1341 = vmatprep.mubr.bf16.mxu0 0
        %1342 = vmatmul.mubr.bf16.gmra.mxu0 %v1299
        %v1343 = vpop.f32.mrf.mxu0
        %v1344 = vadd.f32 0.0, %v1343
        %v1345 = vpop.f32.mrf.mxu0
        %v1346 = vpop.f32.mrf.mxu0
        %v1347 = vadd.f32 0.0, %v1346
        %v1348 = vpop.f32.mrf.mxu0
        %1349 = vdwg.mxu0
        %v1354 = vunpack.c.l.b16 %v1277
        %v1355 = vunpack.c.l.b16 %v1278
        %v1356 = vunpack.c.l.b16 %v1279
        %v1357 = vunpack.c.l.b16 %v1280
        %v1358 = vpack.c.b16 %v1355, %v1354
        %v1359 = vpack.c.b16 %v1357, %v1356
        %v1361 = vsel %vm740, %v1358, 0
        %v1364 = vsel %vm740, %v1359, 0
        %1366 = vmatprep.subr.bf16.mxu0 0
        %1367 = vmatpush1.bf16.msra.mxu0 0
        %1368 = vmatprep.subr.bf16.mxu0 0
        %1369 = vmatpush1.bf16.msra.mxu0 0
        %1370 = vmatprep.subr.bf16.mxu0 0
        %1371 = vmatpush1.bf16.msra.mxu0 0
        %1372 = vmatprep.subr.bf16.mxu0 0
        %1373 = vmatpush1.bf16.msra.mxu0 0
        %1374 = vmatprep.subr.bf16.mxu0 0
        %1375 = vmatpush1.bf16.msra.mxu0 0
        %1376 = vmatprep.subr.bf16.mxu0 0
        %1377 = vmatpush1.bf16.msra.mxu0 0
        %1378 = vmatprep.subr.bf16.mxu0 0
        %1379 = vmatpush1.bf16.msra.mxu0 %v1276
        %1380 = vmatprep.subr.bf16.mxu0 0
        %1381 = vmatpush1.bf16.msra.mxu0 %v1275
        %1382 = vmatprep.subr.bf16.mxu0 0
        %1383 = vmatpush2.bf16.msra.mxu0 0
        %1384 = vmatprep.subr.bf16.mxu0 0
        %1385 = vmatpush2.bf16.msra.mxu0 0
        %1386 = vmatprep.subr.bf16.mxu0 0
        %1387 = vmatpush2.bf16.msra.mxu0 0
        %1388 = vmatprep.subr.bf16.mxu0 0
        %1389 = vmatpush2.bf16.msra.mxu0 0
        %1390 = vmatprep.subr.bf16.mxu0 0
        %1391 = vmatpush2.bf16.msra.mxu0 0
        %1392 = vmatprep.subr.bf16.mxu0 0
        %1393 = vmatpush2.bf16.msra.mxu0 0
        %1394 = vmatprep.subr.bf16.mxu0 0
        %1395 = vmatpush2.bf16.msra.mxu0 0
        %1396 = vmatprep.subr.bf16.mxu0 0
        %1397 = vmatpush2.bf16.msra.mxu0 0
        %1398 = vmatprep.mubr.bf16.mxu0 0
        %1399 = vmatmul.mubr.bf16.gmra.mxu0 %v1361
        %v1400 = vpop.f32.mrf.mxu0
        %v1401 = vadd.f32 %v1336, %v1400
        %v1402 = vpop.f32.mrf.mxu0
        %v1403 = vpop.f32.mrf.mxu0
        %v1404 = vadd.f32 %v1339, %v1403
        %v1405 = vpop.f32.mrf.mxu0
        %1406 = vmatprep.mubr.bf16.mxu0 0
        %1407 = vmatmul.mubr.bf16.gmra.mxu0 %v1364
        %v1408 = vpop.f32.mrf.mxu0
        %v1409 = vadd.f32 %v1344, %v1408
        %v1410 = vpop.f32.mrf.mxu0
        %v1411 = vpop.f32.mrf.mxu0
        %v1412 = vadd.f32 %v1347, %v1411
        %v1413 = vpop.f32.mrf.mxu0
        %1414 = vdwg.mxu0
        %v1415 = vld [vmem:[%s17] sm:$0xf]
        %v1416 = vld [vmem:[%s17 + $0x4] sm:$0xf]
        %v1417 = vld [vmem:[%s17 + $0x8] sm:$0xf]
        %v1418 = vld [vmem:[%s17 + $0xc] sm:$0xf]
        %v1419 = vunpack.c.l.bf16 %v1415
        %v1420 = vunpack.c.l.bf16 %v1416
        %v1421 = vunpack.c.l.bf16 %v1417
        %v1422 = vunpack.c.l.bf16 %v1418
        %1424 = vset.pattern.permute.xlu0 0
        %1425 = vperm.xlu0 %1424, %v1419
        %v1426 = vpop.permute.xlu0 %1425
        %1429 = vset.pattern.permute.xlu0 0
        %1430 = vperm.xlu0 %1429, %v1420
        %v1431 = vpop.permute.xlu0 %1430
        %1434 = vset.pattern.permute.xlu0 0
        %1435 = vperm.xlu0 %1434, %v1421
        %v1436 = vpop.permute.xlu0 %1435
        %1439 = vset.pattern.permute.xlu0 0
        %1440 = vperm.xlu0 %1439, %v1422
        %v1441 = vpop.permute.xlu0 %1440
        %v1443 = vadd.f32 %v1401, %v1426
        %v1444 = vadd.f32 %v1404, %v1431
        %v1445 = vadd.f32 %v1409, %v1436
        %v1446 = vadd.f32 %v1412, %v1441
        %v1447 = vmax.f32 %v1443, 0.0
        %v1448 = vmax.f32 %v1444, 0.0
        %v1449 = vmax.f32 %v1445, 0.0
        %v1450 = vmax.f32 %v1446, 0.0
        %v1451 = vpack.c.bf16 %v1448, %v1447
        %v1452 = vpack.c.bf16 %v1450, %v1449
        %v1455 = vunpack.c.l.b16 %v1451
        %v1456 = vunpack.c.h.b16 %v1451
        %v1457 = vunpack.c.l.b16 %v1452
        %v1458 = vunpack.c.h.b16 %v1452
        %v1459 = vpack.c.b16 %v1455, %v1455
        %v1460 = vpack.c.b16 %v1456, %v1456
        %v1461 = vpack.c.b16 %v1457, %v1457
        %v1462 = vpack.c.b16 %v1458, %v1458
        %1467 = vst [vmem:[%s687] sm:$0xf] %v1459
        %1468 = vst [vmem:[%s687 + $0x4] sm:$0xf] %v1460
        %1469 = vst [vmem:[%s687 + $0x8] sm:$0xf] %v1461
        %1470 = vst [vmem:[%s687 + $0xc] sm:$0xf] %v1462
        %s1471 = sand.u32 %s450, 1
        %s1472 = scalar_lea.sflag [#allocation5], %s1471
        %s1473 = sand.u32 %s450, 1
        %s1474 = smul.addr %s1473, 16
        %s1475 = scalar_lea.vmem [#allocation6], %s1474
        // Predicated region
        $region138: #{tpu_custom_call.1} parent=128 // pred_check
          %p1476 = pneg %p460
        $region139: #{tpu_custom_call.1} parent=128 // pred_check_branch
          %1478 = sbr.rel (%p1476) target = $region141
        $region140: #{tpu_custom_call.1} parent=128 // pred_region
          %s1480 = ssub.s32 256, 256
          %1481 = vsyncadd %s1472, %s1480
          %s1482 = smul.addr %s37, 8
          %s1483 = sadd.s32 %s38, %s1482
          %s1484 = smul.addr %s1483, 64
          %s1485 = scalar_lea.hbm %s18, %s1484
          %s1486 = sshll.u32 %s1475, 4
          %s1487 = int_to_ptr.vmem [resolvable:$true] %s1486
          %1492 = dma.vmem_to_hbm [thread:$0]  %s1487, 256, %s1485, %s1472, 64, 128, 4
        $region141: #{tpu_custom_call.1} parent=128 // pred_fallthru
          _
      $region129: #{tpu_custom_call.1} parent=5 // pred_fallthru
        _
      %p1493 = scmp.le.s32.totalorder 2, %s28
      // Predicated region
      $region142: #{tpu_custom_call.1} parent=5 // pred_check
        %p1494 = pneg %p1493
      $region143: #{tpu_custom_call.1} parent=5 // pred_check_branch
        %1496 = sbr.rel (%p1494) target = $region145
      $region144: #{tpu_custom_call.1} parent=5 // pred_region
        %s1497 = ssub.s32 %s28, 2
        // Predicated region
        $region146: #{tpu_custom_call.1} parent=144 // pred_check
          %p1498 = pneg %p466
        $region147: #{tpu_custom_call.1} parent=144 // pred_check_branch
          %1500 = sbr.rel (%p1498) target = $region149
        $region148: #{tpu_custom_call.1} parent=144 // pred_region
          %s1501 = sand.u32 %s451, 1
          %s1502 = scalar_lea.sflag [#allocation5], %s1501
          %s1503 = sand.u32 %s451, 1
          %s1504 = smul.addr %s1503, 16
          %s1505 = scalar_lea.vmem [#allocation6], %s1504
          %1506 = dma.done %s1502, 256
        $region149: #{tpu_custom_call.1} parent=144 // pred_fallthru
          _
      $region145: #{tpu_custom_call.1} parent=5 // pred_fallthru
        _
    $region6: #{tpu_custom_call.1} parent=1 // loop_footer
      %s32 = sadd.s32 1, %s28
    $region7: #{tpu_custom_call.1} parent=1 // loop_footer_branch
      %27 = sbr.rel target = $region3
    $region8: #{tpu_custom_call.1} parent=1 // loop_exit
      _
    %1507 = vsyncpa [#allocation4], 1
    %s1508 = scalar_lea.sflag [#allocation4], 1
    %1509 = vsyncpa %s1508, 1
    %1510 = vsyncpa [#allocation5], 1
    %s1511 = scalar_lea.sflag [#allocation5], 1
    %1512 = vsyncpa %s1511, 1

</llo_original>
